<compile_context>
chip_gen: v7x
topology: tpu7x:2x2x1
jax: 0.10.0
libtpu: 0.0.40
codegen_flags: <defaults>
</compile_context>

<pallas_src>
import functools

import jax
import jax.numpy as jnp
from jax.experimental import pallas as pl
from jax.experimental.pallas import tpu as pltpu


def _gated_prop_kernel(m_in_ref, m_out_ref, x_in_ref, x_out_ref, xc_ref,
                       w_a_ref, w_xzr_ref, w_xt_ref, b_ref, out_ref,
                       *, hidden_dim, n_node, block_b):
    D = hidden_dim
    rows = block_b * n_node

    # Batched adjacency matmuls (MXU), f32 accumulation.
    a_in = jnp.einsum('bnk,bkd->bnd', m_in_ref[...], x_in_ref[...],
                      preferred_element_type=jnp.float32)
    a_out = jnp.einsum('bnk,bkd->bnd', m_out_ref[...], x_out_ref[...],
                       preferred_element_type=jnp.float32)
    a_in = a_in.reshape(rows, D)        # collapse batch into rows
    a_out = a_out.reshape(rows, D)

    xc = xc_ref[...].astype(jnp.float32)                         # (rows, D)

    w_dt = w_a_ref.dtype
    # Fused gate pre-activations, lanes = [z | r | t]             (rows, 3D)
    y = jnp.dot(a_in.astype(w_dt), w_a_ref[pl.ds(0, D), :],
                preferred_element_type=jnp.float32)
    y = y + jnp.dot(a_out.astype(w_dt), w_a_ref[pl.ds(D, D), :],
                    preferred_element_type=jnp.float32)
    y = y + b_ref[...].astype(jnp.float32)

    # x_curt contribution to the z and r gates, lanes = [z | r]   (rows, 2D)
    xzr = jnp.dot(xc.astype(w_dt), w_xzr_ref[...],
                  preferred_element_type=jnp.float32)

    z = jax.nn.sigmoid(y[:, 0:D] + xzr[:, 0:D])
    r = jax.nn.sigmoid(y[:, D:2 * D] + xzr[:, D:2 * D])

    h_pre = y[:, 2 * D:3 * D] + jnp.dot((r * xc).astype(w_dt), w_xt_ref[...],
                                        preferred_element_type=jnp.float32)
    h_hat = jnp.tanh(h_pre)

    out_ref[...] = ((1.0 - z) * xc + z * h_hat).astype(out_ref.dtype)


def gated_propagation(x_in, x_out, x_curt, matrix, params,
                      *, hidden_dim, n_node, n_edge, block_b=None):
    B = x_curt.shape[0]
    NE = n_node * n_edge
    D = hidden_dim

    wz, bz, wr, br, wt, bt = params          # W: (3D, D) transposed, b: (D,)

    # --- wrapper-side packing (cheap XLA ops) -------------------------------
    w_cat = jnp.concatenate([wz, wr, wt], axis=1)                    # (3D, 3D)
    w_a = w_cat[:2 * D, :]                                           # (2D, 3D)
    w_xzr = jnp.concatenate([wz[2 * D:, :], wr[2 * D:, :]], axis=1)  # (D, 2D)
    w_xt = wt[2 * D:, :]                                             # (D, D)
    b_cat = jnp.concatenate([bz, br, bt]).reshape(1, 3 * D)          # (1, 3D)

    # Split adjacency into A_in / A_out (avoids in-kernel lane slicing),
    # match x dtype (torch does matrix.float()).
    m_in = matrix[:, :, :NE].astype(x_in.dtype)
    m_out = matrix[:, :, NE:].astype(x_out.dtype)

    # Flatten node states so gate matmuls / final store are single 2-D tiles.
    xc_flat = x_curt.reshape(B * n_node, D)

    # --- batch blocking ------------------------------------------------------
    if block_b is None:
        # enough rows to feed the MXU (~256 rows per gate matmul) ...
        block_b = max(1, min(B, max(1, 256 // max(n_node, 1))))
        # ... but keep >= 2 grid steps when possible (2 TensorCores on v7x).
        if B // block_b < 2 and B >= 2:
            block_b = B // 2
    block_b = max(1, min(block_b, B))
    while B % block_b != 0:
        block_b -= 1
    grid = (B // block_b,)

    kernel = functools.partial(_gated_prop_kernel, hidden_dim=D,
                               n_node=n_node, block_b=block_b)

    bspec3 = lambda r, c: pl.BlockSpec((block_b, r, c), lambda b: (b, 0, 0))
    rowspec = pl.BlockSpec((block_b * n_node, D), lambda b: (b, 0))
    wspec = lambda r, c: pl.BlockSpec((r, c), lambda b: (0, 0))

    # Advisory cost estimate for XLA's scheduler.
    def _nbytes(a):
        return int(a.size) * a.dtype.itemsize
    flops = int(2 * 2 * B * n_node * NE * D          # adjacency matmuls
                + 2 * B * n_node * 9 * D * D         # fused gate matmuls
                + 10 * B * n_node * D)               # gate elementwise
    transcendentals = int(3 * B * n_node * D)
    bytes_accessed = int(sum(_nbytes(a) for a in
                             (m_in, m_out, x_in, x_out, xc_flat,
                              w_a, w_xzr, w_xt, b_cat)) + _nbytes(xc_flat))
    cost = pl.CostEstimate(flops=flops, transcendentals=transcendentals,
                           bytes_accessed=bytes_accessed)

    # Explicit VMEM budget: double-buffered per-step blocks + resident weights,
    # with headroom (also sized for v7x's smaller 64 MiB VMEM).
    blk_bytes = 4 * block_b * (2 * n_node * NE + 2 * NE * D + 2 * n_node * D)
    w_bytes = 4 * (2 * D * 3 * D + D * 2 * D + D * D + 3 * D)
    vmem_limit = int(min(max(4 * (2 * blk_bytes) + 2 * w_bytes, 8 * 2 ** 20),
                         64 * 2 ** 20))

    out_flat = pl.pallas_call(
        kernel,
        out_shape=jax.ShapeDtypeStruct((B * n_node, D), x_curt.dtype),
        grid=grid,
        in_specs=[
            bspec3(n_node, NE),      # A_in
            bspec3(n_node, NE),      # A_out
            bspec3(NE, D),           # x_in
            bspec3(NE, D),           # x_out
            rowspec,                 # x_curt (flattened rows)
            wspec(2 * D, 3 * D),     # W_a   (fused [z|r|t] for a_in/a_out)
            wspec(D, 2 * D),         # W_xzr (fused [z|r] for x_curt)
            wspec(D, D),             # W_xt  (candidate for r*x_curt)
            wspec(1, 3 * D),         # b_cat
        ],
        out_specs=rowspec,
        compiler_params=pltpu.CompilerParams(
            dimension_semantics=("parallel",),
            vmem_limit_bytes=vmem_limit),
        cost_estimate=cost,
    )(m_in, m_out, x_in, x_out, xc_flat, w_a, w_xzr, w_xt, b_cat)

    return out_flat.reshape(B, n_node, D)


def gated_propagation_ref(x_in, x_out, x_curt, matrix, params,
                          *, hidden_dim, n_node, n_edge):
    """Pure-JAX reference mirroring the PyTorch forward."""
    NE = n_node * n_edge
    wz, bz, wr, br, wt, bt = params
    m_in = matrix[:, :, :NE].astype(jnp.float32)
    m_out = matrix[:, :, NE:].astype(jnp.float32)
    a_in = jnp.einsum('bnk,bkd->bnd', m_in, x_in)
    a_out = jnp.einsum('bnk,bkd->bnd', m_out, x_out)
    a = jnp.concatenate([a_in, a_out, x_curt], axis=2)
    z = jax.nn.sigmoid(a @ wz + bz)
    r = jax.nn.sigmoid(a @ wr + br)
    joint = jnp.concatenate([a_in, a_out, r * x_curt], axis=2)
    h_hat = jnp.tanh(joint @ wt + bt)
    return (1.0 - z) * x_curt + z * h_hat


if __name__ == "__main__":
    hidden_dim = 32
    n_node = 8
    n_edge = 2
    B = 8
    NE = n_node * n_edge

    key = jax.random.PRNGKey(0)
    ks = jax.random.split(key, 10)

    x_in = jax.random.normal(ks[0], (B, NE, hidden_dim), jnp.float32)
    x_out = jax.random.normal(ks[1], (B, NE, hidden_dim), jnp.float32)
    x_curt = jax.random.normal(ks[2], (B, n_node, hidden_dim), jnp.float32)
    # 0/1 adjacency-like matrix, stored float32 (the torch code casts to float)
    matrix = (jax.random.uniform(ks[3], (B, n_node, 2 * NE)) > 0.7).astype(jnp.float32)

    scale = 1.0 / jnp.sqrt(3.0 * hidden_dim)
    wz = jax.random.normal(ks[4], (3 * hidden_dim, hidden_dim), jnp.float32) * scale
    bz = jax.random.normal(ks[5], (hidden_dim,), jnp.float32) * scale
    wr = jax.random.normal(ks[6], (3 * hidden_dim, hidden_dim), jnp.float32) * scale
    br = jax.random.normal(ks[7], (hidden_dim,), jnp.float32) * scale
    wt = jax.random.normal(ks[8], (3 * hidden_dim, hidden_dim), jnp.float32) * scale
    bt = jax.random.normal(ks[9], (hidden_dim,), jnp.float32) * scale
    params = (wz, bz, wr, br, wt, bt)

    out = gated_propagation(x_in, x_out, x_curt, matrix, params,
                            hidden_dim=hidden_dim, n_node=n_node, n_edge=n_edge)
    out = jax.block_until_ready(out)

    ref = gated_propagation_ref(x_in, x_out, x_curt, matrix, params,
                                hidden_dim=hidden_dim, n_node=n_node,
                                n_edge=n_edge)
    assert out.shape == (B, n_node, hidden_dim)
    assert jnp.allclose(out, ref, atol=1e-5, rtol=1e-5), "mismatch vs reference"
    print("KERNEL_OK")
</pallas_src>

<mosaic_0001>
module attributes {stable_mosaic.version = 11 : i64} {
  func.func @_gated_prop_kernel(%arg0: i32, %arg1: memref<4x8x16xf32, #tpu.memory_space<vmem>>, %arg2: memref<4x8x16xf32, #tpu.memory_space<vmem>>, %arg3: memref<4x16x32xf32, #tpu.memory_space<vmem>>, %arg4: memref<4x16x32xf32, #tpu.memory_space<vmem>>, %arg5: memref<32x32xf32, #tpu.memory_space<vmem>>, %arg6: memref<64x96xf32, #tpu.memory_space<vmem>>, %arg7: memref<32x64xf32, #tpu.memory_space<vmem>>, %arg8: memref<32x32xf32, #tpu.memory_space<vmem>>, %arg9: memref<1x96xf32, #tpu.memory_space<vmem>>, %arg10: memref<32x32xf32, #tpu.memory_space<vmem>>) attributes {dimension_semantics = [#tpu.dimension_semantics<parallel>], iteration_bounds = array<i64: 2>, scalar_prefetch = 0 : i64, scratch_operands = 0 : i64, tpu.core_type = #tpu.core_type<tc>, window_params = [{transform_indices = @transform_0, window_bounds = array<i64: 4, 8, 16>}, {transform_indices = @transform_1, window_bounds = array<i64: 4, 8, 16>}, {transform_indices = @transform_2, window_bounds = array<i64: 4, 16, 32>}, {transform_indices = @transform_3, window_bounds = array<i64: 4, 16, 32>}, {transform_indices = @transform_4, window_bounds = array<i64: 32, 32>}, {pipeline_mode = #tpu.pipeline_mode<synchronous>, transform_indices = @transform_5, window_bounds = array<i64: 64, 96>}, {pipeline_mode = #tpu.pipeline_mode<synchronous>, transform_indices = @transform_6, window_bounds = array<i64: 32, 64>}, {pipeline_mode = #tpu.pipeline_mode<synchronous>, transform_indices = @transform_7, window_bounds = array<i64: 32, 32>}, {pipeline_mode = #tpu.pipeline_mode<synchronous>, transform_indices = @transform_8, window_bounds = array<i64: 1, 96>}, {transform_indices = @transform_9, window_bounds = array<i64: 32, 32>}]} {
    %c0 = arith.constant 0 : index
    %c0_0 = arith.constant 0 : index
    %c0_1 = arith.constant 0 : index
    %0 = vector.load %arg1[%c0, %c0_0, %c0_1] : memref<4x8x16xf32, #tpu.memory_space<vmem>>, vector<4x8x16xf32>
    %c0_2 = arith.constant 0 : index
    %c0_3 = arith.constant 0 : index
    %c0_4 = arith.constant 0 : index
    %1 = vector.load %arg3[%c0_2, %c0_3, %c0_4] : memref<4x16x32xf32, #tpu.memory_space<vmem>>, vector<4x16x32xf32>
    "tpu.trace_start"() <{level = 10 : i32, message = "bnk,bkd->bnd"}> : () -> ()
    %cst = arith.constant dense<0.000000e+00> : vector<4x8x32xf32>
    %2 = tpu.matmul %0, %1, %cst {dimension_numbers = #tpu.dot_dimension_numbers<[2], [1], [1], [2], [0, 0, 0, 1, 1, 2], [0], [0]>} : vector<4x8x16xf32>, vector<4x16x32xf32>, vector<4x8x32xf32> -> vector<4x8x32xf32>
    "tpu.trace_stop"() : () -> ()
    %c0_5 = arith.constant 0 : index
    %c0_6 = arith.constant 0 : index
    %c0_7 = arith.constant 0 : index
    %3 = vector.load %arg2[%c0_5, %c0_6, %c0_7] : memref<4x8x16xf32, #tpu.memory_space<vmem>>, vector<4x8x16xf32>
    %c0_8 = arith.constant 0 : index
    %c0_9 = arith.constant 0 : index
    %c0_10 = arith.constant 0 : index
    %4 = vector.load %arg4[%c0_8, %c0_9, %c0_10] : memref<4x16x32xf32, #tpu.memory_space<vmem>>, vector<4x16x32xf32>
    "tpu.trace_start"() <{level = 10 : i32, message = "bnk,bkd->bnd"}> : () -> ()
    %cst_11 = arith.constant dense<0.000000e+00> : vector<4x8x32xf32>
    %5 = tpu.matmul %3, %4, %cst_11 {dimension_numbers = #tpu.dot_dimension_numbers<[2], [1], [1], [2], [0, 0, 0, 1, 1, 2], [0], [0]>} : vector<4x8x16xf32>, vector<4x16x32xf32>, vector<4x8x32xf32> -> vector<4x8x32xf32>
    "tpu.trace_stop"() : () -> ()
    %6 = vector.shape_cast %2 : vector<4x8x32xf32> to vector<32x32xf32>
    %7 = vector.shape_cast %5 : vector<4x8x32xf32> to vector<32x32xf32>
    %c0_12 = arith.constant 0 : index
    %c0_13 = arith.constant 0 : index
    %8 = vector.load %arg5[%c0_12, %c0_13] : memref<32x32xf32, #tpu.memory_space<vmem>>, vector<32x32xf32>
    %c0_14 = arith.constant 0 : index
    %c0_15 = arith.constant 0 : index
    %9 = vector.load %arg6[%c0_14, %c0_15] : memref<64x96xf32, #tpu.memory_space<vmem>>, vector<32x96xf32>
    %cst_16 = arith.constant dense<0.000000e+00> : vector<32x96xf32>
    %10 = tpu.matmul %6, %9, %cst_16 {dimension_numbers = #tpu.dot_dimension_numbers<[1], [0], [0], [1], [0, 0, 1, 1], [], []>} : vector<32x32xf32>, vector<32x96xf32>, vector<32x96xf32> -> vector<32x96xf32>
    %c32 = arith.constant 32 : index
    %c0_17 = arith.constant 0 : index
    %11 = vector.load %arg6[%c32, %c0_17] : memref<64x96xf32, #tpu.memory_space<vmem>>, vector<32x96xf32>
    %cst_18 = arith.constant dense<0.000000e+00> : vector<32x96xf32>
    %12 = tpu.matmul %7, %11, %cst_18 {dimension_numbers = #tpu.dot_dimension_numbers<[1], [0], [0], [1], [0, 0, 1, 1], [], []>} : vector<32x32xf32>, vector<32x96xf32>, vector<32x96xf32> -> vector<32x96xf32>
    %13 = arith.addf %10, %12 : vector<32x96xf32>
    %c0_19 = arith.constant 0 : index
    %c0_20 = arith.constant 0 : index
    %14 = vector.load %arg9[%c0_19, %c0_20] : memref<1x96xf32, #tpu.memory_space<vmem>>, vector<1x96xf32>
    %15 = vector.broadcast %14 : vector<1x96xf32> to vector<32x96xf32>
    %16 = arith.addf %13, %15 : vector<32x96xf32>
    %c0_21 = arith.constant 0 : index
    %c0_22 = arith.constant 0 : index
    %17 = vector.load %arg7[%c0_21, %c0_22] : memref<32x64xf32, #tpu.memory_space<vmem>>, vector<32x64xf32>
    %cst_23 = arith.constant dense<0.000000e+00> : vector<32x64xf32>
    %18 = tpu.matmul %8, %17, %cst_23 {dimension_numbers = #tpu.dot_dimension_numbers<[1], [0], [0], [1], [0, 0, 1, 1], [], []>} : vector<32x32xf32>, vector<32x64xf32>, vector<32x64xf32> -> vector<32x64xf32>
    %19 = vector.extract_strided_slice %16 {offsets = [0, 0], sizes = [32, 32], strides = [1, 1]} : vector<32x96xf32> to vector<32x32xf32>
    %20 = vector.extract_strided_slice %18 {offsets = [0, 0], sizes = [32, 32], strides = [1, 1]} : vector<32x64xf32> to vector<32x32xf32>
    %21 = arith.addf %19, %20 : vector<32x32xf32>
    %22 = arith.negf %21 : vector<32x32xf32>
    %23 = math.exp %22 : vector<32x32xf32>
    %cst_24 = arith.constant 1.000000e+00 : f32
    %24 = vector.broadcast %cst_24 : f32 to vector<32x32xf32>
    %25 = arith.addf %24, %23 : vector<32x32xf32>
    %26 = arith.divf %24, %25 : vector<32x32xf32>
    %27 = vector.extract_strided_slice %16 {offsets = [0, 32], sizes = [32, 32], strides = [1, 1]} : vector<32x96xf32> to vector<32x32xf32>
    %28 = vector.extract_strided_slice %18 {offsets = [0, 32], sizes = [32, 32], strides = [1, 1]} : vector<32x64xf32> to vector<32x32xf32>
    %29 = arith.addf %27, %28 : vector<32x32xf32>
    %30 = arith.negf %29 : vector<32x32xf32>
    %31 = math.exp %30 : vector<32x32xf32>
    %cst_25 = arith.constant 1.000000e+00 : f32
    %32 = vector.broadcast %cst_25 : f32 to vector<32x32xf32>
    %33 = arith.addf %32, %31 : vector<32x32xf32>
    %34 = arith.divf %32, %33 : vector<32x32xf32>
    %35 = vector.extract_strided_slice %16 {offsets = [0, 64], sizes = [32, 32], strides = [1, 1]} : vector<32x96xf32> to vector<32x32xf32>
    %36 = arith.mulf %34, %8 : vector<32x32xf32>
    %c0_26 = arith.constant 0 : index
    %c0_27 = arith.constant 0 : index
    %37 = vector.load %arg8[%c0_26, %c0_27] : memref<32x32xf32, #tpu.memory_space<vmem>>, vector<32x32xf32>
    %cst_28 = arith.constant dense<0.000000e+00> : vector<32x32xf32>
    %38 = tpu.matmul %36, %37, %cst_28 {dimension_numbers = #tpu.dot_dimension_numbers<[1], [0], [0], [1], [0, 0, 1, 1], [], []>} : vector<32x32xf32>, vector<32x32xf32>, vector<32x32xf32> -> vector<32x32xf32>
    %39 = arith.addf %35, %38 : vector<32x32xf32>
    %40 = math.tanh %39 : vector<32x32xf32>
    %cst_29 = arith.constant 1.000000e+00 : f32
    %41 = vector.broadcast %cst_29 : f32 to vector<32x32xf32>
    %42 = arith.subf %41, %26 : vector<32x32xf32>
    %43 = arith.mulf %42, %8 : vector<32x32xf32>
    %44 = arith.mulf %26, %40 : vector<32x32xf32>
    %45 = arith.addf %43, %44 : vector<32x32xf32>
    %c0_30 = arith.constant 0 : index
    %c0_31 = arith.constant 0 : index
    %46 = vector.load %arg10[%c0_30, %c0_31] : memref<32x32xf32, #tpu.memory_space<vmem>>, vector<32x32xf32>
    tpu.vector_store %arg10[%c0_30, %c0_31], %45 {strides = array<i32>} : memref<32x32xf32, #tpu.memory_space<vmem>>, vector<32x32xf32>,
    return
  }
  func.func @transform_0(%arg0: i32) -> (i32, i32, i32) {
    %c0_i32 = arith.constant 0 : i32
    %c0_i32_0 = arith.constant 0 : i32
    %c0_i32_1 = arith.constant 0 : i32
    return %arg0, %c0_i32, %c0_i32_0 : i32, i32, i32
  }
  func.func @transform_1(%arg0: i32) -> (i32, i32, i32) {
    %c0_i32 = arith.constant 0 : i32
    %c0_i32_0 = arith.constant 0 : i32
    %c0_i32_1 = arith.constant 0 : i32
    return %arg0, %c0_i32, %c0_i32_0 : i32, i32, i32
  }
  func.func @transform_2(%arg0: i32) -> (i32, i32, i32) {
    %c0_i32 = arith.constant 0 : i32
    %c0_i32_0 = arith.constant 0 : i32
    %c0_i32_1 = arith.constant 0 : i32
    return %arg0, %c0_i32, %c0_i32_0 : i32, i32, i32
  }
  func.func @transform_3(%arg0: i32) -> (i32, i32, i32) {
    %c0_i32 = arith.constant 0 : i32
    %c0_i32_0 = arith.constant 0 : i32
    %c0_i32_1 = arith.constant 0 : i32
    return %arg0, %c0_i32, %c0_i32_0 : i32, i32, i32
  }
  func.func @transform_4(%arg0: i32) -> (i32, i32) {
    %c0_i32 = arith.constant 0 : i32
    %c0_i32_0 = arith.constant 0 : i32
    return %arg0, %c0_i32 : i32, i32
  }
  func.func @transform_5(%arg0: i32) -> (i32, i32) {
    %c0_i32 = arith.constant 0 : i32
    %c0_i32_0 = arith.constant 0 : i32
    %c0_i32_1 = arith.constant 0 : i32
    return %c0_i32, %c0_i32_0 : i32, i32
  }
  func.func @transform_6(%arg0: i32) -> (i32, i32) {
    %c0_i32 = arith.constant 0 : i32
    %c0_i32_0 = arith.constant 0 : i32
    %c0_i32_1 = arith.constant 0 : i32
    return %c0_i32, %c0_i32_0 : i32, i32
  }
  func.func @transform_7(%arg0: i32) -> (i32, i32) {
    %c0_i32 = arith.constant 0 : i32
    %c0_i32_0 = arith.constant 0 : i32
    %c0_i32_1 = arith.constant 0 : i32
    return %c0_i32, %c0_i32_0 : i32, i32
  }
  func.func @transform_8(%arg0: i32) -> (i32, i32) {
    %c0_i32 = arith.constant 0 : i32
    %c0_i32_0 = arith.constant 0 : i32
    %c0_i32_1 = arith.constant 0 : i32
    return %c0_i32, %c0_i32_0 : i32, i32
  }
  func.func @transform_9(%arg0: i32) -> (i32, i32) {
    %c0_i32 = arith.constant 0 : i32
    %c0_i32_0 = arith.constant 0 : i32
    return %arg0, %c0_i32 : i32, i32
  }
}

</mosaic_0001>

<llo_original>
// kernel: tpu_custom_call.1
$region0: #{tpu_custom_call.1}
  #allocation0 [shape = 'u32[]', space=smem, size = 0x4, offset = 0x4, fixed_abs, tag = 'smem constant byte address 0x4 - core index']
  #allocation1 [shape = 'u32[144,128]{1,0:T(1,128)}', space=vmem, size = 0x12000, scoped, tag = 'internal scratch']
  %s0 = inlined_call_operand.vmem [shape: f32[8,8,16], index: 0, kind: input, shape index: {}]
  %s1 = inlined_call_operand.hbm [shape: f32[8,8,16], index: 1, kind: input, shape index: {}]
  %s2 = inlined_call_operand.hbm [shape: f32[8,16,32], index: 2, kind: input, shape index: {}]
  %s3 = inlined_call_operand.hbm [shape: f32[8,16,32], index: 3, kind: input, shape index: {}]
  %s4 = inlined_call_operand.vmem [shape: f32[64,32], index: 4, kind: input, shape index: {}]
  %s5 = inlined_call_operand.hbm [shape: f32[64,96], index: 5, kind: input, shape index: {}]
  %s6 = inlined_call_operand.vmem [shape: f32[32,64], index: 6, kind: input, shape index: {}]
  %s7 = inlined_call_operand.hbm [shape: f32[32,32], index: 7, kind: input, shape index: {}]
  %s8 = inlined_call_operand.vmem [shape: f32[1,96], index: 8, kind: input, shape index: {}]
  %s9 = inlined_call_operand.vmem [shape: f32[64,32], index: 9, kind: output, shape index: {}]
  %s10 = sld [smem:[#allocation0]]
  $region89: #{tpu_custom_call.1} parent=0
    _
  %s12 = ssub.s32 1, %s10
  %s13 = scalar_select 0, %s12, %s10
  $region1: #{tpu_custom_call.1} parent=0
    #allocation2 [shape = 'u8[32768]{0}', space=vmem, size = 0x8000, scoped, tag = 'input window, operand 1']
    #allocation3 [shape = 's32[2]{0}', space=sflag, size = 0x8, scoped, tag = 'scoped memory for tpu_custom_call.1']
    #allocation4 [shape = 'u8[65536]{0}', space=vmem, size = 0x10000, scoped, tag = 'input window, operand 2']
    #allocation5 [shape = 's32[2]{0}', space=sflag, size = 0x8, scoped, tag = 'scoped memory for tpu_custom_call.1']
    #allocation6 [shape = 'u8[65536]{0}', space=vmem, size = 0x10000, scoped, tag = 'input window, operand 3']
    #allocation7 [shape = 'u8[32768]{0}', space=vmem, size = 0x8000, scoped, tag = 'input window, operand 5, single buffered']
    #allocation8 [shape = 's32[1]{0}', space=sflag, size = 0x4, scoped, tag = 'scoped memory for tpu_custom_call.1']
    #allocation9 [shape = 'u8[16384]{0}', space=vmem, size = 0x4000, scoped, tag = 'input window, operand 7, single buffered']
    %14 = vsyncpa [#allocation3], 0
    %s15 = scalar_lea.sflag [#allocation3], 1
    %16 = vsyncpa %s15, 0
    %17 = vsyncpa [#allocation5], 0
    %s18 = scalar_lea.sflag [#allocation5], 1
    %19 = vsyncpa %s18, 0
    %20 = vsyncpa [#allocation8], 0
    loop: start=0, step=1, limit=4
    $region2: #{tpu_custom_call.1} parent=1 // loop_pre_header
      _
    $region3: #{tpu_custom_call.1} parent=1 // loop_header
      %s22 = sphi 0, %s26
      %p23 = scmp.ge.s32.totalorder %s22, 4
      %s32 = sphi 0, %s34
      %s35 = sphi 0, %s32
      %s36 = sphi 0, %s35
      %s52 = sphi 0, %s36
      %s58 = sphi 0, %s60
      %s61 = sphi 0, %s58
      %s62 = sphi 0, %s61
      %s78 = sphi 0, %s62
      %s84 = sphi 0, %s86
      %s87 = sphi 0, %s84
      %s88 = sphi 0, %s87
      %s104 = sphi 0, %s88
      %s110 = sphi 0, %s112
      %s113 = sphi 0, %s110
      %s114 = sphi 0, %s113
      %s130 = sphi 0, %s114
      %s136 = sphi 0, %s138
      %s139 = sphi 0, %s136
      %s140 = sphi 0, %s139
      %s156 = sphi 0, %s140
      %s160 = sphi 0, %s160
      %s162 = sphi 0, %s160
      %s163 = sphi 0, %s162
      %s177 = sphi 0, %s163
      %s181 = sphi 0, %s181
      %s183 = sphi 0, %s181
      %s184 = sphi 0, %s183
      %s198 = sphi 0, %s184
      %s202 = sphi 0, %s202
      %s204 = sphi 0, %s202
      %s205 = sphi 0, %s204
      %s219 = sphi 0, %s205
      %s223 = sphi 0, %s223
      %s225 = sphi 0, %s223
      %s226 = sphi 0, %s225
      %s240 = sphi 0, %s226
      %s246 = sphi 0, %s248
      %s249 = sphi 0, %s246
      %s250 = sphi 0, %s249
      %s266 = sphi 0, %s250
    $region4: #{tpu_custom_call.1} parent=1 // loop_header_branch
      %25 = sbr.rel (%p23) target = $region8
    $region5: #{tpu_custom_call.1} parent=1 // loop_body
      %s27 = ssub.s32 %s22, 1
      %s28 = ssub.s32 %s22, 2
      %s29 = sadd.s32 %s22, 1
      %s30 = ssub.s32 %s22, %s29
      %p31 = scmp.eq.s32.totalorder %s30, 0
      %s33 = sadd.s32 %s32, 1
      %s34 = scalar_select %p31, %s32, %s33
      %p37 = pneg %p31
      %p38 = scmp.eq.s32.totalorder %s22, 1
      %p39 = por %p37, %p38
      %p40 = scmp.ne.s32.totalorder %s32, %s35
      %p41 = scmp.eq.s32.totalorder %s22, 0
      %p42 = por %p40, %p41
      %p43 = scmp.ne.s32.totalorder %s32, %s35
      %p44 = scmp.eq.s32.totalorder %s27, 1
      %p45 = por %p43, %p44
      %p46 = scmp.ne.s32.totalorder %s35, %s36
      %p47 = scmp.eq.s32.totalorder %s27, 0
      %p48 = por %p46, %p47
      %p49 = scmp.ne.s32.totalorder %s35, %s36
      %p50 = scmp.eq.s32.totalorder %s28, 1
      %p51 = por %p49, %p50
      %p53 = scmp.ne.s32.totalorder %s36, %s52
      %p54 = scmp.eq.s32.totalorder %s28, 0
      %p55 = por %p53, %p54
      %s56 = ssub.s32 %s22, %s29
      %p57 = scmp.eq.s32.totalorder %s56, 0
      %s59 = sadd.s32 %s58, 1
      %s60 = scalar_select %p57, %s58, %s59
      %p63 = pneg %p57
      %p64 = scmp.eq.s32.totalorder %s22, 1
      %p65 = por %p63, %p64
      %p66 = scmp.ne.s32.totalorder %s58, %s61
      %p67 = scmp.eq.s32.totalorder %s22, 0
      %p68 = por %p66, %p67
      %p69 = scmp.ne.s32.totalorder %s58, %s61
      %p70 = scmp.eq.s32.totalorder %s27, 1
      %p71 = por %p69, %p70
      %p72 = scmp.ne.s32.totalorder %s61, %s62
      %p73 = scmp.eq.s32.totalorder %s27, 0
      %p74 = por %p72, %p73
      %p75 = scmp.ne.s32.totalorder %s61, %s62
      %p76 = scmp.eq.s32.totalorder %s28, 1
      %p77 = por %p75, %p76
      %p79 = scmp.ne.s32.totalorder %s62, %s78
      %p80 = scmp.eq.s32.totalorder %s28, 0
      %p81 = por %p79, %p80
      %s82 = ssub.s32 %s22, %s29
      %p83 = scmp.eq.s32.totalorder %s82, 0
      %s85 = sadd.s32 %s84, 1
      %s86 = scalar_select %p83, %s84, %s85
      %p89 = pneg %p83
      %p90 = scmp.eq.s32.totalorder %s22, 1
      %p91 = por %p89, %p90
      %p92 = scmp.ne.s32.totalorder %s84, %s87
      %p93 = scmp.eq.s32.totalorder %s22, 0
      %p94 = por %p92, %p93
      %p95 = scmp.ne.s32.totalorder %s84, %s87
      %p96 = scmp.eq.s32.totalorder %s27, 1
      %p97 = por %p95, %p96
      %p98 = scmp.ne.s32.totalorder %s87, %s88
      %p99 = scmp.eq.s32.totalorder %s27, 0
      %p100 = por %p98, %p99
      %p101 = scmp.ne.s32.totalorder %s87, %s88
      %p102 = scmp.eq.s32.totalorder %s28, 1
      %p103 = por %p101, %p102
      %p105 = scmp.ne.s32.totalorder %s88, %s104
      %p106 = scmp.eq.s32.totalorder %s28, 0
      %p107 = por %p105, %p106
      %s108 = ssub.s32 %s22, %s29
      %p109 = scmp.eq.s32.totalorder %s108, 0
      %s111 = sadd.s32 %s110, 1
      %s112 = scalar_select %p109, %s110, %s111
      %p115 = pneg %p109
      %p116 = scmp.eq.s32.totalorder %s22, 1
      %p117 = por %p115, %p116
      %p118 = scmp.ne.s32.totalorder %s110, %s113
      %p119 = scmp.eq.s32.totalorder %s22, 0
      %p120 = por %p118, %p119
      %p121 = scmp.ne.s32.totalorder %s110, %s113
      %p122 = scmp.eq.s32.totalorder %s27, 1
      %p123 = por %p121, %p122
      %p124 = scmp.ne.s32.totalorder %s113, %s114
      %p125 = scmp.eq.s32.totalorder %s27, 0
      %p126 = por %p124, %p125
      %p127 = scmp.ne.s32.totalorder %s113, %s114
      %p128 = scmp.eq.s32.totalorder %s28, 1
      %p129 = por %p127, %p128
      %p131 = scmp.ne.s32.totalorder %s114, %s130
      %p132 = scmp.eq.s32.totalorder %s28, 0
      %p133 = por %p131, %p132
      %s134 = ssub.s32 %s22, %s29
      %p135 = scmp.eq.s32.totalorder %s134, 0
      %s137 = sadd.s32 %s136, 1
      %s138 = scalar_select %p135, %s136, %s137
      %p141 = pneg %p135
      %p142 = scmp.eq.s32.totalorder %s22, 1
      %p143 = por %p141, %p142
      %p144 = scmp.ne.s32.totalorder %s136, %s139
      %p145 = scmp.eq.s32.totalorder %s22, 0
      %p146 = por %p144, %p145
      %p147 = scmp.ne.s32.totalorder %s136, %s139
      %p148 = scmp.eq.s32.totalorder %s27, 1
      %p149 = por %p147, %p148
      %p150 = scmp.ne.s32.totalorder %s139, %s140
      %p151 = scmp.eq.s32.totalorder %s27, 0
      %p152 = por %p150, %p151
      %p153 = scmp.ne.s32.totalorder %s139, %s140
      %p154 = scmp.eq.s32.totalorder %s28, 1
      %p155 = por %p153, %p154
      %p157 = scmp.ne.s32.totalorder %s140, %s156
      %p158 = scmp.eq.s32.totalorder %s28, 0
      %p159 = por %p157, %p158
      %s161 = sadd.s32 %s160, 1
      %p164 = scmp.eq.s32.totalorder %s22, 1
      %p165 = scmp.ne.s32.totalorder %s160, %s162
      %p166 = scmp.eq.s32.totalorder %s22, 0
      %p167 = por %p165, %p166
      %p168 = scmp.ne.s32.totalorder %s160, %s162
      %p169 = scmp.eq.s32.totalorder %s27, 1
      %p170 = por %p168, %p169
      %p171 = scmp.ne.s32.totalorder %s162, %s163
      %p172 = scmp.eq.s32.totalorder %s27, 0
      %p173 = por %p171, %p172
      %p174 = scmp.ne.s32.totalorder %s162, %s163
      %p175 = scmp.eq.s32.totalorder %s28, 1
      %p176 = por %p174, %p175
      %p178 = scmp.ne.s32.totalorder %s163, %s177
      %p179 = scmp.eq.s32.totalorder %s28, 0
      %p180 = por %p178, %p179
      %s182 = sadd.s32 %s181, 1
      %p185 = scmp.eq.s32.totalorder %s22, 1
      %p186 = scmp.ne.s32.totalorder %s181, %s183
      %p187 = scmp.eq.s32.totalorder %s22, 0
      %p188 = por %p186, %p187
      %p189 = scmp.ne.s32.totalorder %s181, %s183
      %p190 = scmp.eq.s32.totalorder %s27, 1
      %p191 = por %p189, %p190
      %p192 = scmp.ne.s32.totalorder %s183, %s184
      %p193 = scmp.eq.s32.totalorder %s27, 0
      %p194 = por %p192, %p193
      %p195 = scmp.ne.s32.totalorder %s183, %s184
      %p196 = scmp.eq.s32.totalorder %s28, 1
      %p197 = por %p195, %p196
      %p199 = scmp.ne.s32.totalorder %s184, %s198
      %p200 = scmp.eq.s32.totalorder %s28, 0
      %p201 = por %p199, %p200
      %s203 = sadd.s32 %s202, 1
      %p206 = scmp.eq.s32.totalorder %s22, 1
      %p207 = scmp.ne.s32.totalorder %s202, %s204
      %p208 = scmp.eq.s32.totalorder %s22, 0
      %p209 = por %p207, %p208
      %p210 = scmp.ne.s32.totalorder %s202, %s204
      %p211 = scmp.eq.s32.totalorder %s27, 1
      %p212 = por %p210, %p211
      %p213 = scmp.ne.s32.totalorder %s204, %s205
      %p214 = scmp.eq.s32.totalorder %s27, 0
      %p215 = por %p213, %p214
      %p216 = scmp.ne.s32.totalorder %s204, %s205
      %p217 = scmp.eq.s32.totalorder %s28, 1
      %p218 = por %p216, %p217
      %p220 = scmp.ne.s32.totalorder %s205, %s219
      %p221 = scmp.eq.s32.totalorder %s28, 0
      %p222 = por %p220, %p221
      %s224 = sadd.s32 %s223, 1
      %p227 = scmp.eq.s32.totalorder %s22, 1
      %p228 = scmp.ne.s32.totalorder %s223, %s225
      %p229 = scmp.eq.s32.totalorder %s22, 0
      %p230 = por %p228, %p229
      %p231 = scmp.ne.s32.totalorder %s223, %s225
      %p232 = scmp.eq.s32.totalorder %s27, 1
      %p233 = por %p231, %p232
      %p234 = scmp.ne.s32.totalorder %s225, %s226
      %p235 = scmp.eq.s32.totalorder %s27, 0
      %p236 = por %p234, %p235
      %p237 = scmp.ne.s32.totalorder %s225, %s226
      %p238 = scmp.eq.s32.totalorder %s28, 1
      %p239 = por %p237, %p238
      %p241 = scmp.ne.s32.totalorder %s226, %s240
      %p242 = scmp.eq.s32.totalorder %s28, 0
      %p243 = por %p241, %p242
      %s244 = ssub.s32 %s22, %s29
      %p245 = scmp.eq.s32.totalorder %s244, 0
      %s247 = sadd.s32 %s246, 1
      %s248 = scalar_select %p245, %s246, %s247
      %p251 = pneg %p245
      %p252 = scmp.eq.s32.totalorder %s22, 1
      %p253 = por %p251, %p252
      %p254 = scmp.ne.s32.totalorder %s246, %s249
      %p255 = scmp.eq.s32.totalorder %s22, 0
      %p256 = por %p254, %p255
      %p257 = scmp.ne.s32.totalorder %s246, %s249
      %p258 = scmp.eq.s32.totalorder %s27, 1
      %p259 = por %p257, %p258
      %p260 = scmp.ne.s32.totalorder %s249, %s250
      %p261 = scmp.eq.s32.totalorder %s27, 0
      %p262 = por %p260, %p261
      %p263 = scmp.ne.s32.totalorder %s249, %s250
      %p264 = scmp.eq.s32.totalorder %s28, 1
      %p265 = por %p263, %p264
      %p267 = scmp.ne.s32.totalorder %s250, %s266
      %p268 = scmp.eq.s32.totalorder %s28, 0
      %p269 = por %p267, %p268
      %p270 = scmp.le.s32.totalorder 1, %s22
      %p271 = scmp.lt.s32.totalorder %s22, 3
      %p272 = pnand %p270, %p271
      %p273 = pneg %p272
      // Predicated region
      $region9: #{tpu_custom_call.1} parent=5 // pred_check
        _
      $region10: #{tpu_custom_call.1} parent=5 // pred_check_branch
        %275 = sbr.rel (%p272) target = $region12
      $region11: #{tpu_custom_call.1} parent=5 // pred_region
        %s276 = ssub.s32 %s22, 1
        // Predicated region
        $region13: #{tpu_custom_call.1} parent=11 // pred_check
          %p277 = pneg %p173
        $region14: #{tpu_custom_call.1} parent=11 // pred_check_branch
          %279 = sbr.rel (%p277) target = $region16
        $region15: #{tpu_custom_call.1} parent=11 // pred_region
          %s281 = ssub.s32 1024, 1024
          %282 = vsyncadd [#allocation8], %s281
          %s283 = sshll.u32 [#allocation7], 4
          %s284 = int_to_ptr.vmem [resolvable:$true] %s283
          %289 = dma.hbm_to_vmem [thread:$0]  %s5, 1024, %s284, [#allocation8], 128, 128, 8
        $region16: #{tpu_custom_call.1} parent=11 // pred_fallthru
          _
        // Predicated region
        $region17: #{tpu_custom_call.1} parent=11 // pred_check
          %p290 = pneg %p194
        $region18: #{tpu_custom_call.1} parent=11 // pred_check_branch
          %292 = sbr.rel (%p290) target = $region20
        $region19: #{tpu_custom_call.1} parent=11 // pred_region
          _
        $region20: #{tpu_custom_call.1} parent=11 // pred_fallthru
          _
        // Predicated region
        $region21: #{tpu_custom_call.1} parent=11 // pred_check
          %p293 = pneg %p215
        $region22: #{tpu_custom_call.1} parent=11 // pred_check_branch
          %295 = sbr.rel (%p293) target = $region24
        $region23: #{tpu_custom_call.1} parent=11 // pred_region
          %s297 = ssub.s32 512, 512
          %298 = vsyncadd [#allocation8], %s297
          %s299 = sshll.u32 [#allocation9], 4
          %s300 = int_to_ptr.vmem [resolvable:$true] %s299
          %305 = dma.hbm_to_vmem [thread:$0]  %s7, 512, %s300, [#allocation8], 128, 128, 8
        $region24: #{tpu_custom_call.1} parent=11 // pred_fallthru
          _
        // Predicated region
        $region25: #{tpu_custom_call.1} parent=11 // pred_check
          %p306 = pneg %p236
        $region26: #{tpu_custom_call.1} parent=11 // pred_check_branch
          %308 = sbr.rel (%p306) target = $region28
        $region27: #{tpu_custom_call.1} parent=11 // pred_region
          _
        $region28: #{tpu_custom_call.1} parent=11 // pred_fallthru
          _
      $region12: #{tpu_custom_call.1} parent=5 // pred_fallthru
        _
      %p309 = scmp.lt.s32.totalorder %s22, 2
      // Predicated region
      $region29: #{tpu_custom_call.1} parent=5 // pred_check
        %p310 = pneg %p309
      $region30: #{tpu_custom_call.1} parent=5 // pred_check_branch
        %312 = sbr.rel (%p310) target = $region32
      $region31: #{tpu_custom_call.1} parent=5 // pred_region
        // Predicated region
        $region33: #{tpu_custom_call.1} parent=31 // pred_check
          %p313 = pneg %p42
        $region34: #{tpu_custom_call.1} parent=31 // pred_check_branch
          %315 = sbr.rel (%p313) target = $region36
        $region35: #{tpu_custom_call.1} parent=31 // pred_region
          %s316 = smul.u32 4, %s22
          %p317 = scmp.lt.s32.totalorder %s316, 7
          %s318 = scalar_select %p317, %s316, 7
          %s319 = smul.addr %s318, 8
          %s320 = scalar_lea.vmem %s0, %s319
          %s321 = smul.u32 4, %s22
        $region36: #{tpu_custom_call.1} parent=31 // pred_fallthru
          _
        // Predicated region
        $region37: #{tpu_custom_call.1} parent=31 // pred_check
          %p322 = pneg %p68
        $region38: #{tpu_custom_call.1} parent=31 // pred_check_branch
          %324 = sbr.rel (%p322) target = $region40
        $region39: #{tpu_custom_call.1} parent=31 // pred_region
          %s325 = sand.u32 %s58, 1
          %s326 = scalar_lea.sflag [#allocation3], %s325
          %s327 = sand.u32 %s58, 1
          %s328 = smul.addr %s327, 32
          %s329 = scalar_lea.vmem [#allocation2], %s328
          %s330 = smul.u32 4, %s22
          %s332 = ssub.s32 512, 512
          %333 = vsyncadd %s326, %s332
          %s334 = smul.addr %s330, 128
          %s335 = scalar_lea.hbm %s1, %s334
          %s336 = sshll.u32 %s329, 4
          %s337 = int_to_ptr.vmem [resolvable:$true] %s336
          %342 = dma.hbm_to_vmem [thread:$0]  %s335, 512, %s337, %s326, 128, 128, 8
        $region40: #{tpu_custom_call.1} parent=31 // pred_fallthru
          _
        // Predicated region
        $region41: #{tpu_custom_call.1} parent=31 // pred_check
          %p343 = pneg %p94
        $region42: #{tpu_custom_call.1} parent=31 // pred_check_branch
          %345 = sbr.rel (%p343) target = $region44
        $region43: #{tpu_custom_call.1} parent=31 // pred_region
          %s346 = sand.u32 %s22, 1
          %s347 = scalar_lea.sflag [#allocation5], %s346
          %s348 = sand.u32 %s84, 1
          %s349 = smul.addr %s348, 64
          %s350 = scalar_lea.vmem [#allocation4], %s349
          %s351 = smul.u32 4, %s22
          %s353 = ssub.s32 1024, 1024
          %354 = vsyncadd %s347, %s353
          %s355 = smul.addr %s351, 2
          %s356 = smul.addr %s355, 128
          %s357 = scalar_lea.hbm %s2, %s356
          %s358 = sshll.u32 %s350, 4
          %s359 = int_to_ptr.vmem [resolvable:$true] %s358
          %364 = dma.hbm_to_vmem [thread:$0]  %s357, 1024, %s359, %s347, 128, 128, 8
        $region44: #{tpu_custom_call.1} parent=31 // pred_fallthru
          _
        // Predicated region
        $region45: #{tpu_custom_call.1} parent=31 // pred_check
          %p365 = pneg %p120
        $region46: #{tpu_custom_call.1} parent=31 // pred_check_branch
          %367 = sbr.rel (%p365) target = $region48
        $region47: #{tpu_custom_call.1} parent=31 // pred_region
          %s368 = sand.u32 %s22, 1
          %s369 = scalar_lea.sflag [#allocation5], %s368
          %s370 = sand.u32 %s110, 1
          %s371 = smul.addr %s370, 64
          %s372 = scalar_lea.vmem [#allocation6], %s371
          %s373 = smul.u32 4, %s22
          %s375 = ssub.s32 1024, 1024
          %376 = vsyncadd %s369, %s375
          %s377 = smul.addr %s373, 2
          %s378 = smul.addr %s377, 128
          %s379 = scalar_lea.hbm %s3, %s378
          %s380 = sshll.u32 %s372, 4
          %s381 = int_to_ptr.vmem [resolvable:$true] %s380
          %386 = dma.hbm_to_vmem [thread:$0]  %s379, 1024, %s381, %s369, 128, 128, 8
        $region48: #{tpu_custom_call.1} parent=31 // pred_fallthru
          _
        // Predicated region
        $region49: #{tpu_custom_call.1} parent=31 // pred_check
          %p387 = pneg %p146
        $region50: #{tpu_custom_call.1} parent=31 // pred_check_branch
          %389 = sbr.rel (%p387) target = $region52
        $region51: #{tpu_custom_call.1} parent=31 // pred_region
          %s390 = smul.u32 4, %s22
          %p391 = scmp.lt.s32.totalorder %s390, 7
          %s392 = scalar_select %p391, %s390, 7
          %s393 = smul.addr %s392, 8
          %s394 = scalar_lea.vmem %s4, %s393
          %s395 = smul.u32 4, %s22
        $region52: #{tpu_custom_call.1} parent=31 // pred_fallthru
          _
      $region32: #{tpu_custom_call.1} parent=5 // pred_fallthru
        _
      %p396 = scmp.le.s32.totalorder 1, %s22
      %p397 = scmp.lt.s32.totalorder %s22, 3
      %p398 = pnand %p396, %p397
      %p399 = pneg %p398
      // Predicated region
      $region53: #{tpu_custom_call.1} parent=5 // pred_check
        _
      $region54: #{tpu_custom_call.1} parent=5 // pred_check_branch
        %401 = sbr.rel (%p398) target = $region56
      $region55: #{tpu_custom_call.1} parent=5 // pred_region
        %s402 = ssub.s32 %s22, 1
        %s403 = sand.u32 %s61, 1
        %s404 = scalar_lea.sflag [#allocation3], %s403
        %s405 = sand.u32 %s61, 1
        %s406 = smul.addr %s405, 32
        %s407 = scalar_lea.vmem [#allocation2], %s406
        // Predicated region
        $region57: #{tpu_custom_call.1} parent=55 // pred_check
          %p408 = pneg %p74
        $region58: #{tpu_custom_call.1} parent=55 // pred_check_branch
          %410 = sbr.rel (%p408) target = $region60
        $region59: #{tpu_custom_call.1} parent=55 // pred_region
          %411 = dma.done %s404, 512
        $region60: #{tpu_custom_call.1} parent=55 // pred_fallthru
          _
        %s412 = sand.u32 %s27, 1
        %s413 = scalar_lea.sflag [#allocation5], %s412
        %s414 = sand.u32 %s87, 1
        %s415 = smul.addr %s414, 64
        %s416 = scalar_lea.vmem [#allocation4], %s415
        // Predicated region
        $region61: #{tpu_custom_call.1} parent=55 // pred_check
          %p417 = pneg %p100
        $region62: #{tpu_custom_call.1} parent=55 // pred_check_branch
          %419 = sbr.rel (%p417) target = $region64
        $region63: #{tpu_custom_call.1} parent=55 // pred_region
          %420 = dma.done %s413, 1024
        $region64: #{tpu_custom_call.1} parent=55 // pred_fallthru
          _
        %s421 = sand.u32 %s27, 1
        %s422 = scalar_lea.sflag [#allocation5], %s421
        %s423 = sand.u32 %s113, 1
        %s424 = smul.addr %s423, 64
        %s425 = scalar_lea.vmem [#allocation6], %s424
        // Predicated region
        $region65: #{tpu_custom_call.1} parent=55 // pred_check
          %p426 = pneg %p126
        $region66: #{tpu_custom_call.1} parent=55 // pred_check_branch
          %428 = sbr.rel (%p426) target = $region68
        $region67: #{tpu_custom_call.1} parent=55 // pred_region
          %429 = dma.done %s422, 1024
        $region68: #{tpu_custom_call.1} parent=55 // pred_fallthru
          _
        // Predicated region
        $region69: #{tpu_custom_call.1} parent=55 // pred_check
          %p430 = pneg %p173
        $region70: #{tpu_custom_call.1} parent=55 // pred_check_branch
          %432 = sbr.rel (%p430) target = $region72
        $region71: #{tpu_custom_call.1} parent=55 // pred_region
          %433 = dma.done [#allocation8], 1024
        $region72: #{tpu_custom_call.1} parent=55 // pred_fallthru
          _
        // Predicated region
        $region73: #{tpu_custom_call.1} parent=55 // pred_check
          %p434 = pneg %p215
        $region74: #{tpu_custom_call.1} parent=55 // pred_check_branch
          %436 = sbr.rel (%p434) target = $region76
        $region75: #{tpu_custom_call.1} parent=55 // pred_region
          %437 = dma.done [#allocation8], 512
        $region76: #{tpu_custom_call.1} parent=55 // pred_fallthru
          _
        %s438 = smul.u32 4, %s27
        %p439 = scmp.lt.s32.totalorder %s438, 7
        %s440 = scalar_select %p439, %s438, 7
        %s441 = smul.addr %s440, 8
        %s442 = scalar_lea.vmem %s0, %s441
        %p443 = pneg %p48
        %p444 = pneg %p45
        %s445 = sand.u32 %s61, 1
        %s446 = scalar_lea.sflag [#allocation3], %s445
        %s447 = sand.u32 %s61, 1
        %s448 = smul.addr %s447, 32
        %s449 = scalar_lea.vmem [#allocation2], %s448
        %p450 = pneg %p74
        %p451 = pneg %p71
        %s452 = sand.u32 %s27, 1
        %s453 = scalar_lea.sflag [#allocation5], %s452
        %s454 = sand.u32 %s87, 1
        %s455 = smul.addr %s454, 64
        %s456 = scalar_lea.vmem [#allocation4], %s455
        %p457 = pneg %p100
        %p458 = pneg %p97
        %s459 = sand.u32 %s27, 1
        %s460 = scalar_lea.sflag [#allocation5], %s459
        %s461 = sand.u32 %s113, 1
        %s462 = smul.addr %s461, 64
        %s463 = scalar_lea.vmem [#allocation6], %s462
        %p464 = pneg %p126
        %p465 = pneg %p123
        %s466 = smul.u32 4, %s27
        %p467 = scmp.lt.s32.totalorder %s466, 7
        %s468 = scalar_select %p467, %s466, 7
        %s469 = smul.addr %s468, 8
        %s470 = scalar_lea.vmem %s4, %s469
        %p471 = pneg %p152
        %p472 = pneg %p149
        %p473 = pneg %p173
        %p474 = pneg %p170
        %p475 = pneg %p194
        %p476 = pneg %p191
        %p477 = pneg %p215
        %p478 = pneg %p212
        %p479 = pneg %p236
        %p480 = pneg %p233
        %p481 = pneg %p262
        %p482 = pneg %p259
        %s483 = smul.u32 4, %s27
        %p484 = scmp.lt.s32.totalorder %s483, 7
        %s485 = scalar_select %p484, %s483, 7
        %s486 = smul.addr %s485, 8
        %s487 = scalar_lea.vmem %s9, %s486
        %s488 = smul.u32 4, %s27
        %p489 = scmp.lt.s32.totalorder %s488, 7
        %s490 = scalar_select %p489, %s488, 7
        %s491 = smul.addr %s490, 8
        %s492 = scalar_lea.vmem %s0, %s491
        %s493 = smul.u32 4, %s27
        %s494 = smul.u32 4, %s27
        %s495 = smul.u32 4, %s27
        %s496 = smul.u32 4, %s27
        %s497 = smul.u32 4, %s27
        %p498 = scmp.lt.s32.totalorder %s497, 7
        %s499 = scalar_select %p498, %s497, 7
        %s500 = smul.addr %s499, 8
        %s501 = scalar_lea.vmem %s4, %s500
        %s502 = smul.u32 4, %s27
        %s503 = smul.u32 4, %s27
        %p504 = scmp.lt.s32.totalorder %s503, 7
        %s505 = scalar_select %p504, %s503, 7
        %s506 = smul.addr %s505, 8
        %s507 = scalar_lea.vmem %s9, %s506
        %s508 = smul.u32 4, %s27
        %v509 = vld [vmem:[%s492] sm:$0xff]
        %v510 = vld [vmem:[%s492 + $0x8] sm:$0xff]
        %v511 = vld [vmem:[%s492 + $0x10] sm:$0xff]
        %v512 = vld [vmem:[%s492 + $0x18] sm:$0xff]
        %v513 = vld [vmem:[%s416] sm:$0xff]
        %v514 = vld [vmem:[%s416 + $0x8] sm:$0xff]
        %v515 = vld [vmem:[%s416 + $0x10] sm:$0xff]
        %v516 = vld [vmem:[%s416 + $0x18] sm:$0xff]
        %v517 = vld [vmem:[%s416 + $0x20] sm:$0xff]
        %v518 = vld [vmem:[%s416 + $0x28] sm:$0xff]
        %v519 = vld [vmem:[%s416 + $0x30] sm:$0xff]
        %v520 = vld [vmem:[%s416 + $0x38] sm:$0xff]
        %vm521 = vcmask 130048
        %v523 = vsel %vm521, %v509, 0
        %525 = vmatprep.subr.mxu0 0.0
        %526 = vmatpush1.msra.mxu0 %v513
        %527 = vmatprep.subr.mxu0 0.0
        %528 = vmatpush1.msra.mxu0 %v514
        %529 = vmatprep.subr.mxu0 0.0
        %530 = vmatpush1.msra.mxu0 0.0
        %531 = vmatprep.subr.mxu0 0.0
        %532 = vmatpush1.msra.mxu0 0.0
        %533 = vmatprep.subr.mxu0 0.0
        %534 = vmatpush1.msra.mxu0 0.0
        %535 = vmatprep.subr.mxu0 0.0
        %536 = vmatpush1.msra.mxu0 0.0
        %537 = vmatprep.subr.mxu0 0.0
        %538 = vmatpush1.msra.mxu0 0.0
        %539 = vmatprep.subr.mxu0 0.0
        %540 = vmatpush1.msra.mxu0 0.0
        %541 = vmatprep.subr.mxu0 0.0
        %542 = vmatpush1.msra.mxu0 0.0
        %543 = vmatprep.subr.mxu0 0.0
        %544 = vmatpush1.msra.mxu0 0.0
        %545 = vmatprep.subr.mxu0 0.0
        %546 = vmatpush1.msra.mxu0 0.0
        %547 = vmatprep.subr.mxu0 0.0
        %548 = vmatpush1.msra.mxu0 0.0
        %549 = vmatprep.subr.mxu0 0.0
        %550 = vmatpush1.msra.mxu0 0.0
        %551 = vmatprep.subr.mxu0 0.0
        %552 = vmatpush1.msra.mxu0 0.0
        %553 = vmatprep.subr.mxu0 0.0
        %554 = vmatpush1.msra.mxu0 0.0
        %555 = vmatprep.subr.mxu0 0.0
        %556 = vmatpush1.msra.mxu0 0.0
        %557 = vmatprep.subr.mxu0 0.0
        %558 = vmatpush1.msra.mxu0 0.0
        %559 = vmatprep.subr.mxu0 0.0
        %560 = vmatpush1.msra.mxu0 0.0
        %561 = vmatprep.subr.mxu0 0.0
        %562 = vmatpush1.msra.mxu0 0.0
        %563 = vmatprep.subr.mxu0 0.0
        %564 = vmatpush1.msra.mxu0 0.0
        %565 = vmatprep.subr.mxu0 0.0
        %566 = vmatpush1.msra.mxu0 0.0
        %567 = vmatprep.subr.mxu0 0.0
        %568 = vmatpush1.msra.mxu0 0.0
        %569 = vmatprep.subr.mxu0 0.0
        %570 = vmatpush1.msra.mxu0 0.0
        %571 = vmatprep.subr.mxu0 0.0
        %572 = vmatpush1.msra.mxu0 0.0
        %573 = vmatprep.subr.mxu0 0.0
        %574 = vmatpush1.msra.mxu0 0.0
        %575 = vmatprep.subr.mxu0 0.0
        %576 = vmatpush1.msra.mxu0 0.0
        %577 = vmatprep.subr.mxu0 0.0
        %578 = vmatpush1.msra.mxu0 0.0
        %579 = vmatprep.subr.mxu0 0.0
        %580 = vmatpush1.msra.mxu0 0.0
        %581 = vmatprep.subr.mxu0 0.0
        %582 = vmatpush1.msra.mxu0 0.0
        %583 = vmatprep.subr.mxu0 0.0
        %584 = vmatpush1.msra.mxu0 0.0
        %585 = vmatprep.subr.mxu0 0.0
        %586 = vmatpush1.msra.mxu0 0.0
        %587 = vmatprep.subr.mxu0 0.0
        %588 = vmatpush1.msra.mxu0 0.0
        %589 = vmatprep.mubr.f32.mxu0 0.0
        %590 = vmatmul.mubr.f32.gmra.mrb[0].mxu0 %v523
        %v591 = vpop.f32.mrb[0].mxu0
        %v592 = vadd.f32 0.0, %v591
        %v593 = vpop.f32.mrb[0].mxu0
        %594 = vdwg.mxu0
        %v596 = vsel %vm521, %v510, 0
        %598 = vmatprep.subr.mxu0 0.0
        %599 = vmatpush1.msra.mxu0 %v515
        %600 = vmatprep.subr.mxu0 0.0
        %601 = vmatpush1.msra.mxu0 %v516
        %602 = vmatprep.subr.mxu0 0.0
        %603 = vmatpush1.msra.mxu0 0.0
        %604 = vmatprep.subr.mxu0 0.0
        %605 = vmatpush1.msra.mxu0 0.0
        %606 = vmatprep.subr.mxu0 0.0
        %607 = vmatpush1.msra.mxu0 0.0
        %608 = vmatprep.subr.mxu0 0.0
        %609 = vmatpush1.msra.mxu0 0.0
        %610 = vmatprep.subr.mxu0 0.0
        %611 = vmatpush1.msra.mxu0 0.0
        %612 = vmatprep.subr.mxu0 0.0
        %613 = vmatpush1.msra.mxu0 0.0
        %614 = vmatprep.subr.mxu0 0.0
        %615 = vmatpush1.msra.mxu0 0.0
        %616 = vmatprep.subr.mxu0 0.0
        %617 = vmatpush1.msra.mxu0 0.0
        %618 = vmatprep.subr.mxu0 0.0
        %619 = vmatpush1.msra.mxu0 0.0
        %620 = vmatprep.subr.mxu0 0.0
        %621 = vmatpush1.msra.mxu0 0.0
        %622 = vmatprep.subr.mxu0 0.0
        %623 = vmatpush1.msra.mxu0 0.0
        %624 = vmatprep.subr.mxu0 0.0
        %625 = vmatpush1.msra.mxu0 0.0
        %626 = vmatprep.subr.mxu0 0.0
        %627 = vmatpush1.msra.mxu0 0.0
        %628 = vmatprep.subr.mxu0 0.0
        %629 = vmatpush1.msra.mxu0 0.0
        %630 = vmatprep.subr.mxu0 0.0
        %631 = vmatpush1.msra.mxu0 0.0
        %632 = vmatprep.subr.mxu0 0.0
        %633 = vmatpush1.msra.mxu0 0.0
        %634 = vmatprep.subr.mxu0 0.0
        %635 = vmatpush1.msra.mxu0 0.0
        %636 = vmatprep.subr.mxu0 0.0
        %637 = vmatpush1.msra.mxu0 0.0
        %638 = vmatprep.subr.mxu0 0.0
        %639 = vmatpush1.msra.mxu0 0.0
        %640 = vmatprep.subr.mxu0 0.0
        %641 = vmatpush1.msra.mxu0 0.0
        %642 = vmatprep.subr.mxu0 0.0
        %643 = vmatpush1.msra.mxu0 0.0
        %644 = vmatprep.subr.mxu0 0.0
        %645 = vmatpush1.msra.mxu0 0.0
        %646 = vmatprep.subr.mxu0 0.0
        %647 = vmatpush1.msra.mxu0 0.0
        %648 = vmatprep.subr.mxu0 0.0
        %649 = vmatpush1.msra.mxu0 0.0
        %650 = vmatprep.subr.mxu0 0.0
        %651 = vmatpush1.msra.mxu0 0.0
        %652 = vmatprep.subr.mxu0 0.0
        %653 = vmatpush1.msra.mxu0 0.0
        %654 = vmatprep.subr.mxu0 0.0
        %655 = vmatpush1.msra.mxu0 0.0
        %656 = vmatprep.subr.mxu0 0.0
        %657 = vmatpush1.msra.mxu0 0.0
        %658 = vmatprep.subr.mxu0 0.0
        %659 = vmatpush1.msra.mxu0 0.0
        %660 = vmatprep.subr.mxu0 0.0
        %661 = vmatpush1.msra.mxu0 0.0
        %662 = vmatprep.mubr.f32.mxu0 0.0
        %663 = vmatmul.mubr.f32.gmra.mrb[0].mxu0 %v596
        %v664 = vpop.f32.mrb[0].mxu0
        %v665 = vadd.f32 0.0, %v664
        %v666 = vpop.f32.mrb[0].mxu0
        %667 = vdwg.mxu0
        %v669 = vsel %vm521, %v511, 0
        %671 = vmatprep.subr.mxu0 0.0
        %672 = vmatpush1.msra.mxu0 %v517
        %673 = vmatprep.subr.mxu0 0.0
        %674 = vmatpush1.msra.mxu0 %v518
        %675 = vmatprep.subr.mxu0 0.0
        %676 = vmatpush1.msra.mxu0 0.0
        %677 = vmatprep.subr.mxu0 0.0
        %678 = vmatpush1.msra.mxu0 0.0
        %679 = vmatprep.subr.mxu0 0.0
        %680 = vmatpush1.msra.mxu0 0.0
        %681 = vmatprep.subr.mxu0 0.0
        %682 = vmatpush1.msra.mxu0 0.0
        %683 = vmatprep.subr.mxu0 0.0
        %684 = vmatpush1.msra.mxu0 0.0
        %685 = vmatprep.subr.mxu0 0.0
        %686 = vmatpush1.msra.mxu0 0.0
        %687 = vmatprep.subr.mxu0 0.0
        %688 = vmatpush1.msra.mxu0 0.0
        %689 = vmatprep.subr.mxu0 0.0
        %690 = vmatpush1.msra.mxu0 0.0
        %691 = vmatprep.subr.mxu0 0.0
        %692 = vmatpush1.msra.mxu0 0.0
        %693 = vmatprep.subr.mxu0 0.0
        %694 = vmatpush1.msra.mxu0 0.0
        %695 = vmatprep.subr.mxu0 0.0
        %696 = vmatpush1.msra.mxu0 0.0
        %697 = vmatprep.subr.mxu0 0.0
        %698 = vmatpush1.msra.mxu0 0.0
        %699 = vmatprep.subr.mxu0 0.0
        %700 = vmatpush1.msra.mxu0 0.0
        %701 = vmatprep.subr.mxu0 0.0
        %702 = vmatpush1.msra.mxu0 0.0
        %703 = vmatprep.subr.mxu0 0.0
        %704 = vmatpush1.msra.mxu0 0.0
        %705 = vmatprep.subr.mxu0 0.0
        %706 = vmatpush1.msra.mxu0 0.0
        %707 = vmatprep.subr.mxu0 0.0
        %708 = vmatpush1.msra.mxu0 0.0
        %709 = vmatprep.subr.mxu0 0.0
        %710 = vmatpush1.msra.mxu0 0.0
        %711 = vmatprep.subr.mxu0 0.0
        %712 = vmatpush1.msra.mxu0 0.0
        %713 = vmatprep.subr.mxu0 0.0
        %714 = vmatpush1.msra.mxu0 0.0
        %715 = vmatprep.subr.mxu0 0.0
        %716 = vmatpush1.msra.mxu0 0.0
        %717 = vmatprep.subr.mxu0 0.0
        %718 = vmatpush1.msra.mxu0 0.0
        %719 = vmatprep.subr.mxu0 0.0
        %720 = vmatpush1.msra.mxu0 0.0
        %721 = vmatprep.subr.mxu0 0.0
        %722 = vmatpush1.msra.mxu0 0.0
        %723 = vmatprep.subr.mxu0 0.0
        %724 = vmatpush1.msra.mxu0 0.0
        %725 = vmatprep.subr.mxu0 0.0
        %726 = vmatpush1.msra.mxu0 0.0
        %727 = vmatprep.subr.mxu0 0.0
        %728 = vmatpush1.msra.mxu0 0.0
        %729 = vmatprep.subr.mxu0 0.0
        %730 = vmatpush1.msra.mxu0 0.0
        %731 = vmatprep.subr.mxu0 0.0
        %732 = vmatpush1.msra.mxu0 0.0
        %733 = vmatprep.subr.mxu0 0.0
        %734 = vmatpush1.msra.mxu0 0.0
        %735 = vmatprep.mubr.f32.mxu0 0.0
        %736 = vmatmul.mubr.f32.gmra.mrb[0].mxu0 %v669
        %v737 = vpop.f32.mrb[0].mxu0
        %v738 = vadd.f32 0.0, %v737
        %v739 = vpop.f32.mrb[0].mxu0
        %740 = vdwg.mxu0
        %v742 = vsel %vm521, %v512, 0
        %744 = vmatprep.subr.mxu0 0.0
        %745 = vmatpush1.msra.mxu0 %v519
        %746 = vmatprep.subr.mxu0 0.0
        %747 = vmatpush1.msra.mxu0 %v520
        %748 = vmatprep.subr.mxu0 0.0
        %749 = vmatpush1.msra.mxu0 0.0
        %750 = vmatprep.subr.mxu0 0.0
        %751 = vmatpush1.msra.mxu0 0.0
        %752 = vmatprep.subr.mxu0 0.0
        %753 = vmatpush1.msra.mxu0 0.0
        %754 = vmatprep.subr.mxu0 0.0
        %755 = vmatpush1.msra.mxu0 0.0
        %756 = vmatprep.subr.mxu0 0.0
        %757 = vmatpush1.msra.mxu0 0.0
        %758 = vmatprep.subr.mxu0 0.0
        %759 = vmatpush1.msra.mxu0 0.0
        %760 = vmatprep.subr.mxu0 0.0
        %761 = vmatpush1.msra.mxu0 0.0
        %762 = vmatprep.subr.mxu0 0.0
        %763 = vmatpush1.msra.mxu0 0.0
        %764 = vmatprep.subr.mxu0 0.0
        %765 = vmatpush1.msra.mxu0 0.0
        %766 = vmatprep.subr.mxu0 0.0
        %767 = vmatpush1.msra.mxu0 0.0
        %768 = vmatprep.subr.mxu0 0.0
        %769 = vmatpush1.msra.mxu0 0.0
        %770 = vmatprep.subr.mxu0 0.0
        %771 = vmatpush1.msra.mxu0 0.0
        %772 = vmatprep.subr.mxu0 0.0
        %773 = vmatpush1.msra.mxu0 0.0
        %774 = vmatprep.subr.mxu0 0.0
        %775 = vmatpush1.msra.mxu0 0.0
        %776 = vmatprep.subr.mxu0 0.0
        %777 = vmatpush1.msra.mxu0 0.0
        %778 = vmatprep.subr.mxu0 0.0
        %779 = vmatpush1.msra.mxu0 0.0
        %780 = vmatprep.subr.mxu0 0.0
        %781 = vmatpush1.msra.mxu0 0.0
        %782 = vmatprep.subr.mxu0 0.0
        %783 = vmatpush1.msra.mxu0 0.0
        %784 = vmatprep.subr.mxu0 0.0
        %785 = vmatpush1.msra.mxu0 0.0
        %786 = vmatprep.subr.mxu0 0.0
        %787 = vmatpush1.msra.mxu0 0.0
        %788 = vmatprep.subr.mxu0 0.0
        %789 = vmatpush1.msra.mxu0 0.0
        %790 = vmatprep.subr.mxu0 0.0
        %791 = vmatpush1.msra.mxu0 0.0
        %792 = vmatprep.subr.mxu0 0.0
        %793 = vmatpush1.msra.mxu0 0.0
        %794 = vmatprep.subr.mxu0 0.0
        %795 = vmatpush1.msra.mxu0 0.0
        %796 = vmatprep.subr.mxu0 0.0
        %797 = vmatpush1.msra.mxu0 0.0
        %798 = vmatprep.subr.mxu0 0.0
        %799 = vmatpush1.msra.mxu0 0.0
        %800 = vmatprep.subr.mxu0 0.0
        %801 = vmatpush1.msra.mxu0 0.0
        %802 = vmatprep.subr.mxu0 0.0
        %803 = vmatpush1.msra.mxu0 0.0
        %804 = vmatprep.subr.mxu0 0.0
        %805 = vmatpush1.msra.mxu0 0.0
        %806 = vmatprep.subr.mxu0 0.0
        %807 = vmatpush1.msra.mxu0 0.0
        %808 = vmatprep.mubr.f32.mxu0 0.0
        %809 = vmatmul.mubr.f32.gmra.mrb[0].mxu0 %v742
        %v810 = vpop.f32.mrb[0].mxu0
        %v811 = vadd.f32 0.0, %v810
        %v812 = vpop.f32.mrb[0].mxu0
        %813 = vdwg.mxu0
        %v814 = vld [vmem:[%s407] sm:$0xff]
        %v815 = vld [vmem:[%s407 + $0x8] sm:$0xff]
        %v816 = vld [vmem:[%s407 + $0x10] sm:$0xff]
        %v817 = vld [vmem:[%s407 + $0x18] sm:$0xff]
        %v818 = vld [vmem:[%s425] sm:$0xff]
        %v819 = vld [vmem:[%s425 + $0x8] sm:$0xff]
        %v820 = vld [vmem:[%s425 + $0x10] sm:$0xff]
        %v821 = vld [vmem:[%s425 + $0x18] sm:$0xff]
        %v822 = vld [vmem:[%s425 + $0x20] sm:$0xff]
        %v823 = vld [vmem:[%s425 + $0x28] sm:$0xff]
        %v824 = vld [vmem:[%s425 + $0x30] sm:$0xff]
        %v825 = vld [vmem:[%s425 + $0x38] sm:$0xff]
        %v827 = vsel %vm521, %v814, 0
        %829 = vmatprep.subr.mxu0 0.0
        %830 = vmatpush1.msra.mxu0 %v818
        %831 = vmatprep.subr.mxu0 0.0
        %832 = vmatpush1.msra.mxu0 %v819
        %833 = vmatprep.subr.mxu0 0.0
        %834 = vmatpush1.msra.mxu0 0.0
        %835 = vmatprep.subr.mxu0 0.0
        %836 = vmatpush1.msra.mxu0 0.0
        %837 = vmatprep.subr.mxu0 0.0
        %838 = vmatpush1.msra.mxu0 0.0
        %839 = vmatprep.subr.mxu0 0.0
        %840 = vmatpush1.msra.mxu0 0.0
        %841 = vmatprep.subr.mxu0 0.0
        %842 = vmatpush1.msra.mxu0 0.0
        %843 = vmatprep.subr.mxu0 0.0
        %844 = vmatpush1.msra.mxu0 0.0
        %845 = vmatprep.subr.mxu0 0.0
        %846 = vmatpush1.msra.mxu0 0.0
        %847 = vmatprep.subr.mxu0 0.0
        %848 = vmatpush1.msra.mxu0 0.0
        %849 = vmatprep.subr.mxu0 0.0
        %850 = vmatpush1.msra.mxu0 0.0
        %851 = vmatprep.subr.mxu0 0.0
        %852 = vmatpush1.msra.mxu0 0.0
        %853 = vmatprep.subr.mxu0 0.0
        %854 = vmatpush1.msra.mxu0 0.0
        %855 = vmatprep.subr.mxu0 0.0
        %856 = vmatpush1.msra.mxu0 0.0
        %857 = vmatprep.subr.mxu0 0.0
        %858 = vmatpush1.msra.mxu0 0.0
        %859 = vmatprep.subr.mxu0 0.0
        %860 = vmatpush1.msra.mxu0 0.0
        %861 = vmatprep.subr.mxu0 0.0
        %862 = vmatpush1.msra.mxu0 0.0
        %863 = vmatprep.subr.mxu0 0.0
        %864 = vmatpush1.msra.mxu0 0.0
        %865 = vmatprep.subr.mxu0 0.0
        %866 = vmatpush1.msra.mxu0 0.0
        %867 = vmatprep.subr.mxu0 0.0
        %868 = vmatpush1.msra.mxu0 0.0
        %869 = vmatprep.subr.mxu0 0.0
        %870 = vmatpush1.msra.mxu0 0.0
        %871 = vmatprep.subr.mxu0 0.0
        %872 = vmatpush1.msra.mxu0 0.0
        %873 = vmatprep.subr.mxu0 0.0
        %874 = vmatpush1.msra.mxu0 0.0
        %875 = vmatprep.subr.mxu0 0.0
        %876 = vmatpush1.msra.mxu0 0.0
        %877 = vmatprep.subr.mxu0 0.0
        %878 = vmatpush1.msra.mxu0 0.0
        %879 = vmatprep.subr.mxu0 0.0
        %880 = vmatpush1.msra.mxu0 0.0
        %881 = vmatprep.subr.mxu0 0.0
        %882 = vmatpush1.msra.mxu0 0.0
        %883 = vmatprep.subr.mxu0 0.0
        %884 = vmatpush1.msra.mxu0 0.0
        %885 = vmatprep.subr.mxu0 0.0
        %886 = vmatpush1.msra.mxu0 0.0
        %887 = vmatprep.subr.mxu0 0.0
        %888 = vmatpush1.msra.mxu0 0.0
        %889 = vmatprep.subr.mxu0 0.0
        %890 = vmatpush1.msra.mxu0 0.0
        %891 = vmatprep.subr.mxu0 0.0
        %892 = vmatpush1.msra.mxu0 0.0
        %893 = vmatprep.mubr.f32.mxu0 0.0
        %894 = vmatmul.mubr.f32.gmra.mrb[0].mxu0 %v827
        %v895 = vpop.f32.mrb[0].mxu0
        %v896 = vadd.f32 0.0, %v895
        %v897 = vpop.f32.mrb[0].mxu0
        %898 = vdwg.mxu0
        %v900 = vsel %vm521, %v815, 0
        %902 = vmatprep.subr.mxu0 0.0
        %903 = vmatpush1.msra.mxu0 %v820
        %904 = vmatprep.subr.mxu0 0.0
        %905 = vmatpush1.msra.mxu0 %v821
        %906 = vmatprep.subr.mxu0 0.0
        %907 = vmatpush1.msra.mxu0 0.0
        %908 = vmatprep.subr.mxu0 0.0
        %909 = vmatpush1.msra.mxu0 0.0
        %910 = vmatprep.subr.mxu0 0.0
        %911 = vmatpush1.msra.mxu0 0.0
        %912 = vmatprep.subr.mxu0 0.0
        %913 = vmatpush1.msra.mxu0 0.0
        %914 = vmatprep.subr.mxu0 0.0
        %915 = vmatpush1.msra.mxu0 0.0
        %916 = vmatprep.subr.mxu0 0.0
        %917 = vmatpush1.msra.mxu0 0.0
        %918 = vmatprep.subr.mxu0 0.0
        %919 = vmatpush1.msra.mxu0 0.0
        %920 = vmatprep.subr.mxu0 0.0
        %921 = vmatpush1.msra.mxu0 0.0
        %922 = vmatprep.subr.mxu0 0.0
        %923 = vmatpush1.msra.mxu0 0.0
        %924 = vmatprep.subr.mxu0 0.0
        %925 = vmatpush1.msra.mxu0 0.0
        %926 = vmatprep.subr.mxu0 0.0
        %927 = vmatpush1.msra.mxu0 0.0
        %928 = vmatprep.subr.mxu0 0.0
        %929 = vmatpush1.msra.mxu0 0.0
        %930 = vmatprep.subr.mxu0 0.0
        %931 = vmatpush1.msra.mxu0 0.0
        %932 = vmatprep.subr.mxu0 0.0
        %933 = vmatpush1.msra.mxu0 0.0
        %934 = vmatprep.subr.mxu0 0.0
        %935 = vmatpush1.msra.mxu0 0.0
        %936 = vmatprep.subr.mxu0 0.0
        %937 = vmatpush1.msra.mxu0 0.0
        %938 = vmatprep.subr.mxu0 0.0
        %939 = vmatpush1.msra.mxu0 0.0
        %940 = vmatprep.subr.mxu0 0.0
        %941 = vmatpush1.msra.mxu0 0.0
        %942 = vmatprep.subr.mxu0 0.0
        %943 = vmatpush1.msra.mxu0 0.0
        %944 = vmatprep.subr.mxu0 0.0
        %945 = vmatpush1.msra.mxu0 0.0
        %946 = vmatprep.subr.mxu0 0.0
        %947 = vmatpush1.msra.mxu0 0.0
        %948 = vmatprep.subr.mxu0 0.0
        %949 = vmatpush1.msra.mxu0 0.0
        %950 = vmatprep.subr.mxu0 0.0
        %951 = vmatpush1.msra.mxu0 0.0
        %952 = vmatprep.subr.mxu0 0.0
        %953 = vmatpush1.msra.mxu0 0.0
        %954 = vmatprep.subr.mxu0 0.0
        %955 = vmatpush1.msra.mxu0 0.0
        %956 = vmatprep.subr.mxu0 0.0
        %957 = vmatpush1.msra.mxu0 0.0
        %958 = vmatprep.subr.mxu0 0.0
        %959 = vmatpush1.msra.mxu0 0.0
        %960 = vmatprep.subr.mxu0 0.0
        %961 = vmatpush1.msra.mxu0 0.0
        %962 = vmatprep.subr.mxu0 0.0
        %963 = vmatpush1.msra.mxu0 0.0
        %964 = vmatprep.subr.mxu0 0.0
        %965 = vmatpush1.msra.mxu0 0.0
        %966 = vmatprep.mubr.f32.mxu0 0.0
        %967 = vmatmul.mubr.f32.gmra.mrb[0].mxu0 %v900
        %v968 = vpop.f32.mrb[0].mxu0
        %v969 = vadd.f32 0.0, %v968
        %v970 = vpop.f32.mrb[0].mxu0
        %971 = vdwg.mxu0
        %v973 = vsel %vm521, %v816, 0
        %975 = vmatprep.subr.mxu0 0.0
        %976 = vmatpush1.msra.mxu0 %v822
        %977 = vmatprep.subr.mxu0 0.0
        %978 = vmatpush1.msra.mxu0 %v823
        %979 = vmatprep.subr.mxu0 0.0
        %980 = vmatpush1.msra.mxu0 0.0
        %981 = vmatprep.subr.mxu0 0.0
        %982 = vmatpush1.msra.mxu0 0.0
        %983 = vmatprep.subr.mxu0 0.0
        %984 = vmatpush1.msra.mxu0 0.0
        %985 = vmatprep.subr.mxu0 0.0
        %986 = vmatpush1.msra.mxu0 0.0
        %987 = vmatprep.subr.mxu0 0.0
        %988 = vmatpush1.msra.mxu0 0.0
        %989 = vmatprep.subr.mxu0 0.0
        %990 = vmatpush1.msra.mxu0 0.0
        %991 = vmatprep.subr.mxu0 0.0
        %992 = vmatpush1.msra.mxu0 0.0
        %993 = vmatprep.subr.mxu0 0.0
        %994 = vmatpush1.msra.mxu0 0.0
        %995 = vmatprep.subr.mxu0 0.0
        %996 = vmatpush1.msra.mxu0 0.0
        %997 = vmatprep.subr.mxu0 0.0
        %998 = vmatpush1.msra.mxu0 0.0
        %999 = vmatprep.subr.mxu0 0.0
        %1000 = vmatpush1.msra.mxu0 0.0
        %1001 = vmatprep.subr.mxu0 0.0
        %1002 = vmatpush1.msra.mxu0 0.0
        %1003 = vmatprep.subr.mxu0 0.0
        %1004 = vmatpush1.msra.mxu0 0.0
        %1005 = vmatprep.subr.mxu0 0.0
        %1006 = vmatpush1.msra.mxu0 0.0
        %1007 = vmatprep.subr.mxu0 0.0
        %1008 = vmatpush1.msra.mxu0 0.0
        %1009 = vmatprep.subr.mxu0 0.0
        %1010 = vmatpush1.msra.mxu0 0.0
        %1011 = vmatprep.subr.mxu0 0.0
        %1012 = vmatpush1.msra.mxu0 0.0
        %1013 = vmatprep.subr.mxu0 0.0
        %1014 = vmatpush1.msra.mxu0 0.0
        %1015 = vmatprep.subr.mxu0 0.0
        %1016 = vmatpush1.msra.mxu0 0.0
        %1017 = vmatprep.subr.mxu0 0.0
        %1018 = vmatpush1.msra.mxu0 0.0
        %1019 = vmatprep.subr.mxu0 0.0
        %1020 = vmatpush1.msra.mxu0 0.0
        %1021 = vmatprep.subr.mxu0 0.0
        %1022 = vmatpush1.msra.mxu0 0.0
        %1023 = vmatprep.subr.mxu0 0.0
        %1024 = vmatpush1.msra.mxu0 0.0
        %1025 = vmatprep.subr.mxu0 0.0
        %1026 = vmatpush1.msra.mxu0 0.0
        %1027 = vmatprep.subr.mxu0 0.0
        %1028 = vmatpush1.msra.mxu0 0.0
        %1029 = vmatprep.subr.mxu0 0.0
        %1030 = vmatpush1.msra.mxu0 0.0
        %1031 = vmatprep.subr.mxu0 0.0
        %1032 = vmatpush1.msra.mxu0 0.0
        %1033 = vmatprep.subr.mxu0 0.0
        %1034 = vmatpush1.msra.mxu0 0.0
        %1035 = vmatprep.subr.mxu0 0.0
        %1036 = vmatpush1.msra.mxu0 0.0
        %1037 = vmatprep.subr.mxu0 0.0
        %1038 = vmatpush1.msra.mxu0 0.0
        %1039 = vmatprep.mubr.f32.mxu0 0.0
        %1040 = vmatmul.mubr.f32.gmra.mrb[0].mxu0 %v973
        %v1041 = vpop.f32.mrb[0].mxu0
        %v1042 = vadd.f32 0.0, %v1041
        %v1043 = vpop.f32.mrb[0].mxu0
        %1044 = vdwg.mxu0
        %v1046 = vsel %vm521, %v817, 0
        %1048 = vmatprep.subr.mxu0 0.0
        %1049 = vmatpush1.msra.mxu0 %v824
        %1050 = vmatprep.subr.mxu0 0.0
        %1051 = vmatpush1.msra.mxu0 %v825
        %1052 = vmatprep.subr.mxu0 0.0
        %1053 = vmatpush1.msra.mxu0 0.0
        %1054 = vmatprep.subr.mxu0 0.0
        %1055 = vmatpush1.msra.mxu0 0.0
        %1056 = vmatprep.subr.mxu0 0.0
        %1057 = vmatpush1.msra.mxu0 0.0
        %1058 = vmatprep.subr.mxu0 0.0
        %1059 = vmatpush1.msra.mxu0 0.0
        %1060 = vmatprep.subr.mxu0 0.0
        %1061 = vmatpush1.msra.mxu0 0.0
        %1062 = vmatprep.subr.mxu0 0.0
        %1063 = vmatpush1.msra.mxu0 0.0
        %1064 = vmatprep.subr.mxu0 0.0
        %1065 = vmatpush1.msra.mxu0 0.0
        %1066 = vmatprep.subr.mxu0 0.0
        %1067 = vmatpush1.msra.mxu0 0.0
        %1068 = vmatprep.subr.mxu0 0.0
        %1069 = vmatpush1.msra.mxu0 0.0
        %1070 = vmatprep.subr.mxu0 0.0
        %1071 = vmatpush1.msra.mxu0 0.0
        %1072 = vmatprep.subr.mxu0 0.0
        %1073 = vmatpush1.msra.mxu0 0.0
        %1074 = vmatprep.subr.mxu0 0.0
        %1075 = vmatpush1.msra.mxu0 0.0
        %1076 = vmatprep.subr.mxu0 0.0
        %1077 = vmatpush1.msra.mxu0 0.0
        %1078 = vmatprep.subr.mxu0 0.0
        %1079 = vmatpush1.msra.mxu0 0.0
        %1080 = vmatprep.subr.mxu0 0.0
        %1081 = vmatpush1.msra.mxu0 0.0
        %1082 = vmatprep.subr.mxu0 0.0
        %1083 = vmatpush1.msra.mxu0 0.0
        %1084 = vmatprep.subr.mxu0 0.0
        %1085 = vmatpush1.msra.mxu0 0.0
        %1086 = vmatprep.subr.mxu0 0.0
        %1087 = vmatpush1.msra.mxu0 0.0
        %1088 = vmatprep.subr.mxu0 0.0
        %1089 = vmatpush1.msra.mxu0 0.0
        %1090 = vmatprep.subr.mxu0 0.0
        %1091 = vmatpush1.msra.mxu0 0.0
        %1092 = vmatprep.subr.mxu0 0.0
        %1093 = vmatpush1.msra.mxu0 0.0
        %1094 = vmatprep.subr.mxu0 0.0
        %1095 = vmatpush1.msra.mxu0 0.0
        %1096 = vmatprep.subr.mxu0 0.0
        %1097 = vmatpush1.msra.mxu0 0.0
        %1098 = vmatprep.subr.mxu0 0.0
        %1099 = vmatpush1.msra.mxu0 0.0
        %1100 = vmatprep.subr.mxu0 0.0
        %1101 = vmatpush1.msra.mxu0 0.0
        %1102 = vmatprep.subr.mxu0 0.0
        %1103 = vmatpush1.msra.mxu0 0.0
        %1104 = vmatprep.subr.mxu0 0.0
        %1105 = vmatpush1.msra.mxu0 0.0
        %1106 = vmatprep.subr.mxu0 0.0
        %1107 = vmatpush1.msra.mxu0 0.0
        %1108 = vmatprep.subr.mxu0 0.0
        %1109 = vmatpush1.msra.mxu0 0.0
        %1110 = vmatprep.subr.mxu0 0.0
        %1111 = vmatpush1.msra.mxu0 0.0
        %1112 = vmatprep.mubr.f32.mxu0 0.0
        %1113 = vmatmul.mubr.f32.gmra.mrb[0].mxu0 %v1046
        %v1114 = vpop.f32.mrb[0].mxu0
        %v1115 = vadd.f32 0.0, %v1114
        %v1116 = vpop.f32.mrb[0].mxu0
        %1117 = vdwg.mxu0
        %v1118 = vld [vmem:[%s501] sm:$0xff]
        %v1119 = vld [vmem:[%s501 + $0x8] sm:$0xff]
        %v1120 = vld [vmem:[%s501 + $0x10] sm:$0xff]
        %v1121 = vld [vmem:[%s501 + $0x18] sm:$0xff]
        %v1122 = vld [vmem:[#allocation7] sm:$0xff]
        %v1123 = vld [vmem:[#allocation7 + $0x8] sm:$0xff]
        %v1124 = vld [vmem:[#allocation7 + $0x10] sm:$0xff]
        %v1125 = vld [vmem:[#allocation7 + $0x18] sm:$0xff]
        %v1126 = vld [vmem:[#allocation7 + $0x20] sm:$0xff]
        %v1127 = vld [vmem:[#allocation7 + $0x28] sm:$0xff]
        %v1128 = vld [vmem:[#allocation7 + $0x30] sm:$0xff]
        %v1129 = vld [vmem:[#allocation7 + $0x38] sm:$0xff]
        %vm1130 = vcmask 261120
        %v1132 = vsel %vm1130, %v896, 0
        %v1135 = vsel %vm1130, %v969, 0
        %v1138 = vsel %vm1130, %v1042, 0
        %v1141 = vsel %vm1130, %v1115, 0
        %1143 = vmatprep.subr.mxu0 0.0
        %1144 = vmatpush1.msra.mxu0 %v1126
        %1145 = vmatprep.subr.mxu0 0.0
        %1146 = vmatpush1.msra.mxu0 %v1127
        %1147 = vmatprep.subr.mxu0 0.0
        %1148 = vmatpush1.msra.mxu0 %v1128
        %1149 = vmatprep.subr.mxu0 0.0
        %1150 = vmatpush1.msra.mxu0 %v1129
        %1151 = vmatprep.subr.mxu0 0.0
        %1152 = vmatpush1.msra.mxu0 0.0
        %1153 = vmatprep.subr.mxu0 0.0
        %1154 = vmatpush1.msra.mxu0 0.0
        %1155 = vmatprep.subr.mxu0 0.0
        %1156 = vmatpush1.msra.mxu0 0.0
        %1157 = vmatprep.subr.mxu0 0.0
        %1158 = vmatpush1.msra.mxu0 0.0
        %1159 = vmatprep.subr.mxu0 0.0
        %1160 = vmatpush1.msra.mxu0 0.0
        %1161 = vmatprep.subr.mxu0 0.0
        %1162 = vmatpush1.msra.mxu0 0.0
        %1163 = vmatprep.subr.mxu0 0.0
        %1164 = vmatpush1.msra.mxu0 0.0
        %1165 = vmatprep.subr.mxu0 0.0
        %1166 = vmatpush1.msra.mxu0 0.0
        %1167 = vmatprep.subr.mxu0 0.0
        %1168 = vmatpush1.msra.mxu0 0.0
        %1169 = vmatprep.subr.mxu0 0.0
        %1170 = vmatpush1.msra.mxu0 0.0
        %1171 = vmatprep.subr.mxu0 0.0
        %1172 = vmatpush1.msra.mxu0 0.0
        %1173 = vmatprep.subr.mxu0 0.0
        %1174 = vmatpush1.msra.mxu0 0.0
        %1175 = vmatprep.subr.mxu0 0.0
        %1176 = vmatpush1.msra.mxu0 0.0
        %1177 = vmatprep.subr.mxu0 0.0
        %1178 = vmatpush1.msra.mxu0 0.0
        %1179 = vmatprep.subr.mxu0 0.0
        %1180 = vmatpush1.msra.mxu0 0.0
        %1181 = vmatprep.subr.mxu0 0.0
        %1182 = vmatpush1.msra.mxu0 0.0
        %1183 = vmatprep.subr.mxu0 0.0
        %1184 = vmatpush1.msra.mxu0 0.0
        %1185 = vmatprep.subr.mxu0 0.0
        %1186 = vmatpush1.msra.mxu0 0.0
        %1187 = vmatprep.subr.mxu0 0.0
        %1188 = vmatpush1.msra.mxu0 0.0
        %1189 = vmatprep.subr.mxu0 0.0
        %1190 = vmatpush1.msra.mxu0 0.0
        %1191 = vmatprep.subr.mxu0 0.0
        %1192 = vmatpush1.msra.mxu0 0.0
        %1193 = vmatprep.subr.mxu0 0.0
        %1194 = vmatpush1.msra.mxu0 0.0
        %1195 = vmatprep.subr.mxu0 0.0
        %1196 = vmatpush1.msra.mxu0 0.0
        %1197 = vmatprep.subr.mxu0 0.0
        %1198 = vmatpush1.msra.mxu0 0.0
        %1199 = vmatprep.subr.mxu0 0.0
        %1200 = vmatpush1.msra.mxu0 0.0
        %1201 = vmatprep.subr.mxu0 0.0
        %1202 = vmatpush1.msra.mxu0 0.0
        %1203 = vmatprep.subr.mxu0 0.0
        %1204 = vmatpush1.msra.mxu0 0.0
        %1205 = vmatprep.subr.mxu0 0.0
        %1206 = vmatpush1.msra.mxu0 0.0
        %1207 = vmatprep.mubr.f32.mxu0 0.0
        %1208 = vmatmul.mubr.f32.gmra.mrb[0].mxu0 %v1132
        %v1209 = vpop.f32.mrb[0].mxu0
        %v1210 = vadd.f32 0.0, %v1209
        %v1211 = vpop.f32.mrb[0].mxu0
        %1212 = vmatprep.mubr.f32.mxu0 0.0
        %1213 = vmatmul.mubr.f32.gmra.mrb[0].mxu0 %v1135
        %v1214 = vpop.f32.mrb[0].mxu0
        %v1215 = vadd.f32 0.0, %v1214
        %v1216 = vpop.f32.mrb[0].mxu0
        %1217 = vmatprep.mubr.f32.mxu0 0.0
        %1218 = vmatmul.mubr.f32.gmra.mrb[0].mxu0 %v1138
        %v1219 = vpop.f32.mrb[0].mxu0
        %v1220 = vadd.f32 0.0, %v1219
        %v1221 = vpop.f32.mrb[0].mxu0
        %1222 = vmatprep.mubr.f32.mxu0 0.0
        %1223 = vmatmul.mubr.f32.gmra.mrb[0].mxu0 %v1141
        %v1224 = vpop.f32.mrb[0].mxu0
        %v1225 = vadd.f32 0.0, %v1224
        %v1226 = vpop.f32.mrb[0].mxu0
        %1227 = vdwg.mxu0
        %v1229 = vsel %vm1130, %v592, 0
        %v1232 = vsel %vm1130, %v665, 0
        %v1235 = vsel %vm1130, %v738, 0
        %v1238 = vsel %vm1130, %v811, 0
        %1240 = vmatprep.subr.mxu0 0.0
        %1241 = vmatpush1.msra.mxu0 %v1122
        %1242 = vmatprep.subr.mxu0 0.0
        %1243 = vmatpush1.msra.mxu0 %v1123
        %1244 = vmatprep.subr.mxu0 0.0
        %1245 = vmatpush1.msra.mxu0 %v1124
        %1246 = vmatprep.subr.mxu0 0.0
        %1247 = vmatpush1.msra.mxu0 %v1125
        %1248 = vmatprep.subr.mxu0 0.0
        %1249 = vmatpush1.msra.mxu0 0.0
        %1250 = vmatprep.subr.mxu0 0.0
        %1251 = vmatpush1.msra.mxu0 0.0
        %1252 = vmatprep.subr.mxu0 0.0
        %1253 = vmatpush1.msra.mxu0 0.0
        %1254 = vmatprep.subr.mxu0 0.0
        %1255 = vmatpush1.msra.mxu0 0.0
        %1256 = vmatprep.subr.mxu0 0.0
        %1257 = vmatpush1.msra.mxu0 0.0
        %1258 = vmatprep.subr.mxu0 0.0
        %1259 = vmatpush1.msra.mxu0 0.0
        %1260 = vmatprep.subr.mxu0 0.0
        %1261 = vmatpush1.msra.mxu0 0.0
        %1262 = vmatprep.subr.mxu0 0.0
        %1263 = vmatpush1.msra.mxu0 0.0
        %1264 = vmatprep.subr.mxu0 0.0
        %1265 = vmatpush1.msra.mxu0 0.0
        %1266 = vmatprep.subr.mxu0 0.0
        %1267 = vmatpush1.msra.mxu0 0.0
        %1268 = vmatprep.subr.mxu0 0.0
        %1269 = vmatpush1.msra.mxu0 0.0
        %1270 = vmatprep.subr.mxu0 0.0
        %1271 = vmatpush1.msra.mxu0 0.0
        %1272 = vmatprep.subr.mxu0 0.0
        %1273 = vmatpush1.msra.mxu0 0.0
        %1274 = vmatprep.subr.mxu0 0.0
        %1275 = vmatpush1.msra.mxu0 0.0
        %1276 = vmatprep.subr.mxu0 0.0
        %1277 = vmatpush1.msra.mxu0 0.0
        %1278 = vmatprep.subr.mxu0 0.0
        %1279 = vmatpush1.msra.mxu0 0.0
        %1280 = vmatprep.subr.mxu0 0.0
        %1281 = vmatpush1.msra.mxu0 0.0
        %1282 = vmatprep.subr.mxu0 0.0
        %1283 = vmatpush1.msra.mxu0 0.0
        %1284 = vmatprep.subr.mxu0 0.0
        %1285 = vmatpush1.msra.mxu0 0.0
        %1286 = vmatprep.subr.mxu0 0.0
        %1287 = vmatpush1.msra.mxu0 0.0
        %1288 = vmatprep.subr.mxu0 0.0
        %1289 = vmatpush1.msra.mxu0 0.0
        %1290 = vmatprep.subr.mxu0 0.0
        %1291 = vmatpush1.msra.mxu0 0.0
        %1292 = vmatprep.subr.mxu0 0.0
        %1293 = vmatpush1.msra.mxu0 0.0
        %1294 = vmatprep.subr.mxu0 0.0
        %1295 = vmatpush1.msra.mxu0 0.0
        %1296 = vmatprep.subr.mxu0 0.0
        %1297 = vmatpush1.msra.mxu0 0.0
        %1298 = vmatprep.subr.mxu0 0.0
        %1299 = vmatpush1.msra.mxu0 0.0
        %1300 = vmatprep.subr.mxu0 0.0
        %1301 = vmatpush1.msra.mxu0 0.0
        %1302 = vmatprep.subr.mxu0 0.0
        %1303 = vmatpush1.msra.mxu0 0.0
        %1304 = vmatprep.mubr.f32.mxu0 0.0
        %1305 = vmatmul.mubr.f32.gmra.mrb[0].mxu0 %v1229
        %v1306 = vpop.f32.mrb[0].mxu0
        %v1307 = vadd.f32 %v1210, %v1306
        %v1308 = vpop.f32.mrb[0].mxu0
        %1309 = vmatprep.mubr.f32.mxu0 0.0
        %1310 = vmatmul.mubr.f32.gmra.mrb[0].mxu0 %v1232
        %v1311 = vpop.f32.mrb[0].mxu0
        %v1312 = vadd.f32 %v1215, %v1311
        %v1313 = vpop.f32.mrb[0].mxu0
        %1314 = vmatprep.mubr.f32.mxu0 0.0
        %1315 = vmatmul.mubr.f32.gmra.mrb[0].mxu0 %v1235
        %v1316 = vpop.f32.mrb[0].mxu0
        %v1317 = vadd.f32 %v1220, %v1316
        %v1318 = vpop.f32.mrb[0].mxu0
        %1319 = vmatprep.mubr.f32.mxu0 0.0
        %1320 = vmatmul.mubr.f32.gmra.mrb[0].mxu0 %v1238
        %v1321 = vpop.f32.mrb[0].mxu0
        %v1322 = vadd.f32 %v1225, %v1321
        %v1323 = vpop.f32.mrb[0].mxu0
        %1324 = vdwg.mxu0
        %v1325 = vld [vmem:[%s8] sm:$0x1]
        %v1327 = vlaneseq
        %v1328 = vshrl.u32 %v1327, 7
        %v1329 = vsub.s32 0, %v1328
        %v1330 = vrot.slane %v1325, %v1329
        %v1332 = vadd.f32 %v1307, %v1330
        %v1333 = vadd.f32 %v1312, %v1330
        %v1334 = vadd.f32 %v1317, %v1330
        %v1335 = vadd.f32 %v1322, %v1330
        %v1336 = vld [vmem:[%s6] sm:$0xff]
        %v1337 = vld [vmem:[%s6 + $0x8] sm:$0xff]
        %v1338 = vld [vmem:[%s6 + $0x10] sm:$0xff]
        %v1339 = vld [vmem:[%s6 + $0x18] sm:$0xff]
        %v1341 = vsel %vm1130, %v1118, 0
        %v1344 = vsel %vm1130, %v1119, 0
        %v1347 = vsel %vm1130, %v1120, 0
        %v1350 = vsel %vm1130, %v1121, 0
        %1352 = vmatprep.subr.mxu0 0.0
        %1353 = vmatpush1.msra.mxu0 %v1336
        %1354 = vmatprep.subr.mxu0 0.0
        %1355 = vmatpush1.msra.mxu0 %v1337
        %1356 = vmatprep.subr.mxu0 0.0
        %1357 = vmatpush1.msra.mxu0 %v1338
        %1358 = vmatprep.subr.mxu0 0.0
        %1359 = vmatpush1.msra.mxu0 %v1339
        %1360 = vmatprep.subr.mxu0 0.0
        %1361 = vmatpush1.msra.mxu0 0.0
        %1362 = vmatprep.subr.mxu0 0.0
        %1363 = vmatpush1.msra.mxu0 0.0
        %1364 = vmatprep.subr.mxu0 0.0
        %1365 = vmatpush1.msra.mxu0 0.0
        %1366 = vmatprep.subr.mxu0 0.0
        %1367 = vmatpush1.msra.mxu0 0.0
        %1368 = vmatprep.subr.mxu0 0.0
        %1369 = vmatpush1.msra.mxu0 0.0
        %1370 = vmatprep.subr.mxu0 0.0
        %1371 = vmatpush1.msra.mxu0 0.0
        %1372 = vmatprep.subr.mxu0 0.0
        %1373 = vmatpush1.msra.mxu0 0.0
        %1374 = vmatprep.subr.mxu0 0.0
        %1375 = vmatpush1.msra.mxu0 0.0
        %1376 = vmatprep.subr.mxu0 0.0
        %1377 = vmatpush1.msra.mxu0 0.0
        %1378 = vmatprep.subr.mxu0 0.0
        %1379 = vmatpush1.msra.mxu0 0.0
        %1380 = vmatprep.subr.mxu0 0.0
        %1381 = vmatpush1.msra.mxu0 0.0
        %1382 = vmatprep.subr.mxu0 0.0
        %1383 = vmatpush1.msra.mxu0 0.0
        %1384 = vmatprep.subr.mxu0 0.0
        %1385 = vmatpush1.msra.mxu0 0.0
        %1386 = vmatprep.subr.mxu0 0.0
        %1387 = vmatpush1.msra.mxu0 0.0
        %1388 = vmatprep.subr.mxu0 0.0
        %1389 = vmatpush1.msra.mxu0 0.0
        %1390 = vmatprep.subr.mxu0 0.0
        %1391 = vmatpush1.msra.mxu0 0.0
        %1392 = vmatprep.subr.mxu0 0.0
        %1393 = vmatpush1.msra.mxu0 0.0
        %1394 = vmatprep.subr.mxu0 0.0
        %1395 = vmatpush1.msra.mxu0 0.0
        %1396 = vmatprep.subr.mxu0 0.0
        %1397 = vmatpush1.msra.mxu0 0.0
        %1398 = vmatprep.subr.mxu0 0.0
        %1399 = vmatpush1.msra.mxu0 0.0
        %1400 = vmatprep.subr.mxu0 0.0
        %1401 = vmatpush1.msra.mxu0 0.0
        %1402 = vmatprep.subr.mxu0 0.0
        %1403 = vmatpush1.msra.mxu0 0.0
        %1404 = vmatprep.subr.mxu0 0.0
        %1405 = vmatpush1.msra.mxu0 0.0
        %1406 = vmatprep.subr.mxu0 0.0
        %1407 = vmatpush1.msra.mxu0 0.0
        %1408 = vmatprep.subr.mxu0 0.0
        %1409 = vmatpush1.msra.mxu0 0.0
        %1410 = vmatprep.subr.mxu0 0.0
        %1411 = vmatpush1.msra.mxu0 0.0
        %1412 = vmatprep.subr.mxu0 0.0
        %1413 = vmatpush1.msra.mxu0 0.0
        %1414 = vmatprep.subr.mxu0 0.0
        %1415 = vmatpush1.msra.mxu0 0.0
        %1416 = vmatprep.mubr.f32.mxu0 0.0
        %1417 = vmatmul.mubr.f32.gmra.mrb[0].mxu0 %v1341
        %v1418 = vpop.f32.mrb[0].mxu0
        %v1419 = vadd.f32 0.0, %v1418
        %v1420 = vpop.f32.mrb[0].mxu0
        %1421 = vmatprep.mubr.f32.mxu0 0.0
        %1422 = vmatmul.mubr.f32.gmra.mrb[0].mxu0 %v1344
        %v1423 = vpop.f32.mrb[0].mxu0
        %v1424 = vadd.f32 0.0, %v1423
        %v1425 = vpop.f32.mrb[0].mxu0
        %1426 = vmatprep.mubr.f32.mxu0 0.0
        %1427 = vmatmul.mubr.f32.gmra.mrb[0].mxu0 %v1347
        %v1428 = vpop.f32.mrb[0].mxu0
        %v1429 = vadd.f32 0.0, %v1428
        %v1430 = vpop.f32.mrb[0].mxu0
        %1431 = vmatprep.mubr.f32.mxu0 0.0
        %1432 = vmatmul.mubr.f32.gmra.mrb[0].mxu0 %v1350
        %v1433 = vpop.f32.mrb[0].mxu0
        %v1434 = vadd.f32 0.0, %v1433
        %v1435 = vpop.f32.mrb[0].mxu0
        %1436 = vdwg.mxu0
        %v1437 = vadd.f32 %v1332, %v1419
        %v1438 = vadd.f32 %v1333, %v1424
        %v1439 = vadd.f32 %v1334, %v1429
        %v1440 = vadd.f32 %v1335, %v1434
        %v1441 = vxor.u32 %v1437, 2147483648
        %v1442 = vxor.u32 %v1438, 2147483648
        %v1443 = vxor.u32 %v1439, 2147483648
        %v1444 = vxor.u32 %v1440, 2147483648
        %v1445 = vmul.f32 %v1441, 1.442695
        %v1446 = vpow.pop %v1445
        %v1447 = vmul.f32 %v1442, 1.442695
        %v1448 = vpow.pop %v1447
        %v1449 = vmul.f32 %v1443, 1.442695
        %v1450 = vpow.pop %v1449
        %v1451 = vmul.f32 %v1444, 1.442695
        %v1452 = vpow.pop %v1451
        %v1453 = vadd.f32 %v1446, 1.0
        %v1454 = vadd.f32 %v1448, 1.0
        %v1455 = vadd.f32 %v1450, 1.0
        %v1456 = vadd.f32 %v1452, 1.0
        %v1457 = vrcp.pop %v1453
        %v1458 = vmul.f32 1.0, %v1457
        %v1459 = vrcp.pop %v1454
        %v1460 = vmul.f32 1.0, %v1459
        %v1461 = vrcp.pop %v1455
        %v1462 = vmul.f32 1.0, %v1461
        %v1463 = vrcp.pop %v1456
        %v1464 = vmul.f32 1.0, %v1463
        %1465 = vrot.lane.b32.xlu0 %v1118, 32
        %v1466 = vpop.permute.xlu0 %1465
        %1467 = vrot.lane.b32.xlu0 %v1119, 32
        %v1468 = vpop.permute.xlu0 %1467
        %1469 = vrot.lane.b32.xlu0 %v1120, 32
        %v1470 = vpop.permute.xlu0 %1469
        %1471 = vrot.lane.b32.xlu0 %v1121, 32
        %v1472 = vpop.permute.xlu0 %1471
        %v1477 = vmul.f32 %v1458, %v1466
        %v1478 = vmul.f32 %v1460, %v1468
        %v1479 = vmul.f32 %v1462, %v1470
        %v1480 = vmul.f32 %v1464, %v1472
        %v1481 = vld [vmem:[#allocation9] sm:$0xff]
        %v1482 = vld [vmem:[#allocation9 + $0x8] sm:$0xff]
        %v1483 = vld [vmem:[#allocation9 + $0x10] sm:$0xff]
        %v1484 = vld [vmem:[#allocation9 + $0x18] sm:$0xff]
        %1489 = vrot.lane.b32.xlu0 %v1477, 96
        %v1490 = vpop.permute.xlu0 %1489
        %1491 = vrot.lane.b32.xlu0 %v1478, 96
        %v1492 = vpop.permute.xlu0 %1491
        %1493 = vrot.lane.b32.xlu0 %v1479, 96
        %v1494 = vpop.permute.xlu0 %1493
        %1495 = vrot.lane.b32.xlu0 %v1480, 96
        %v1496 = vpop.permute.xlu0 %1495
        %v1497 = vsel %vm1130, %v1490, 0
        %v1499 = vsel %vm1130, %v1492, 0
        %v1501 = vsel %vm1130, %v1494, 0
        %v1503 = vsel %vm1130, %v1496, 0
        %1505 = vmatprep.subr.mxu0 0.0
        %1506 = vmatpush1.msra.mxu0 %v1481
        %1507 = vmatprep.subr.mxu0 0.0
        %1508 = vmatpush1.msra.mxu0 %v1482
        %1509 = vmatprep.subr.mxu0 0.0
        %1510 = vmatpush1.msra.mxu0 %v1483
        %1511 = vmatprep.subr.mxu0 0.0
        %1512 = vmatpush1.msra.mxu0 %v1484
        %1513 = vmatprep.subr.mxu0 0.0
        %1514 = vmatpush1.msra.mxu0 0.0
        %1515 = vmatprep.subr.mxu0 0.0
        %1516 = vmatpush1.msra.mxu0 0.0
        %1517 = vmatprep.subr.mxu0 0.0
        %1518 = vmatpush1.msra.mxu0 0.0
        %1519 = vmatprep.subr.mxu0 0.0
        %1520 = vmatpush1.msra.mxu0 0.0
        %1521 = vmatprep.subr.mxu0 0.0
        %1522 = vmatpush1.msra.mxu0 0.0
        %1523 = vmatprep.subr.mxu0 0.0
        %1524 = vmatpush1.msra.mxu0 0.0
        %1525 = vmatprep.subr.mxu0 0.0
        %1526 = vmatpush1.msra.mxu0 0.0
        %1527 = vmatprep.subr.mxu0 0.0
        %1528 = vmatpush1.msra.mxu0 0.0
        %1529 = vmatprep.subr.mxu0 0.0
        %1530 = vmatpush1.msra.mxu0 0.0
        %1531 = vmatprep.subr.mxu0 0.0
        %1532 = vmatpush1.msra.mxu0 0.0
        %1533 = vmatprep.subr.mxu0 0.0
        %1534 = vmatpush1.msra.mxu0 0.0
        %1535 = vmatprep.subr.mxu0 0.0
        %1536 = vmatpush1.msra.mxu0 0.0
        %1537 = vmatprep.subr.mxu0 0.0
        %1538 = vmatpush1.msra.mxu0 0.0
        %1539 = vmatprep.subr.mxu0 0.0
        %1540 = vmatpush1.msra.mxu0 0.0
        %1541 = vmatprep.subr.mxu0 0.0
        %1542 = vmatpush1.msra.mxu0 0.0
        %1543 = vmatprep.subr.mxu0 0.0
        %1544 = vmatpush1.msra.mxu0 0.0
        %1545 = vmatprep.subr.mxu0 0.0
        %1546 = vmatpush1.msra.mxu0 0.0
        %1547 = vmatprep.subr.mxu0 0.0
        %1548 = vmatpush1.msra.mxu0 0.0
        %1549 = vmatprep.subr.mxu0 0.0
        %1550 = vmatpush1.msra.mxu0 0.0
        %1551 = vmatprep.subr.mxu0 0.0
        %1552 = vmatpush1.msra.mxu0 0.0
        %1553 = vmatprep.subr.mxu0 0.0
        %1554 = vmatpush1.msra.mxu0 0.0
        %1555 = vmatprep.subr.mxu0 0.0
        %1556 = vmatpush1.msra.mxu0 0.0
        %1557 = vmatprep.subr.mxu0 0.0
        %1558 = vmatpush1.msra.mxu0 0.0
        %1559 = vmatprep.subr.mxu0 0.0
        %1560 = vmatpush1.msra.mxu0 0.0
        %1561 = vmatprep.subr.mxu0 0.0
        %1562 = vmatpush1.msra.mxu0 0.0
        %1563 = vmatprep.subr.mxu0 0.0
        %1564 = vmatpush1.msra.mxu0 0.0
        %1565 = vmatprep.subr.mxu0 0.0
        %1566 = vmatpush1.msra.mxu0 0.0
        %1567 = vmatprep.subr.mxu0 0.0
        %1568 = vmatpush1.msra.mxu0 0.0
        %1569 = vmatprep.mubr.f32.mxu0 0.0
        %1570 = vmatmul.mubr.f32.gmra.mrb[0].mxu0 %v1497
        %v1571 = vpop.f32.mrb[0].mxu0
        %v1572 = vadd.f32 0.0, %v1571
        %v1573 = vpop.f32.mrb[0].mxu0
        %1574 = vmatprep.mubr.f32.mxu0 0.0
        %1575 = vmatmul.mubr.f32.gmra.mrb[0].mxu0 %v1499
        %v1576 = vpop.f32.mrb[0].mxu0
        %v1577 = vadd.f32 0.0, %v1576
        %v1578 = vpop.f32.mrb[0].mxu0
        %1579 = vmatprep.mubr.f32.mxu0 0.0
        %1580 = vmatmul.mubr.f32.gmra.mrb[0].mxu0 %v1501
        %v1581 = vpop.f32.mrb[0].mxu0
        %v1582 = vadd.f32 0.0, %v1581
        %v1583 = vpop.f32.mrb[0].mxu0
        %1584 = vmatprep.mubr.f32.mxu0 0.0
        %1585 = vmatmul.mubr.f32.gmra.mrb[0].mxu0 %v1503
        %v1586 = vpop.f32.mrb[0].mxu0
        %v1587 = vadd.f32 0.0, %v1586
        %v1588 = vpop.f32.mrb[0].mxu0
        %1589 = vdwg.mxu0
        %1594 = vrot.lane.b32.xlu0 %v1572, 64
        %v1595 = vpop.permute.xlu0 %1594
        %1596 = vrot.lane.b32.xlu0 %v1577, 64
        %v1597 = vpop.permute.xlu0 %1596
        %1598 = vrot.lane.b32.xlu0 %v1582, 64
        %v1599 = vpop.permute.xlu0 %1598
        %1600 = vrot.lane.b32.xlu0 %v1587, 64
        %v1601 = vpop.permute.xlu0 %1600
        %v1606 = vadd.f32 %v1332, %v1595
        %v1607 = vadd.f32 %v1333, %v1597
        %v1608 = vadd.f32 %v1334, %v1599
        %v1609 = vadd.f32 %v1335, %v1601
        %v1610 = vtanh.pop %v1606
        %v1611 = vtanh.pop %v1607
        %v1612 = vtanh.pop %v1608
        %v1613 = vtanh.pop %v1609
        %v1614 = vsub.f32 1.0, %v1458
        %v1615 = vsub.f32 1.0, %v1460
        %v1616 = vsub.f32 1.0, %v1462
        %v1617 = vsub.f32 1.0, %v1464
        %v1618 = vmul.f32 %v1614, %v1118
        %v1619 = vmul.f32 %v1615, %v1119
        %v1620 = vmul.f32 %v1616, %v1120
        %v1621 = vmul.f32 %v1617, %v1121
        %1626 = vrot.lane.b32.xlu0 %v1610, 64
        %v1627 = vpop.permute.xlu0 %1626
        %1628 = vrot.lane.b32.xlu0 %v1611, 64
        %v1629 = vpop.permute.xlu0 %1628
        %1630 = vrot.lane.b32.xlu0 %v1612, 64
        %v1631 = vpop.permute.xlu0 %1630
        %1632 = vrot.lane.b32.xlu0 %v1613, 64
        %v1633 = vpop.permute.xlu0 %1632
        %v1638 = vmul.f32 %v1458, %v1627
        %v1639 = vmul.f32 %v1460, %v1629
        %v1640 = vmul.f32 %v1462, %v1631
        %v1641 = vmul.f32 %v1464, %v1633
        %v1642 = vadd.f32 %v1618, %v1638
        %v1643 = vadd.f32 %v1619, %v1639
        %v1644 = vadd.f32 %v1620, %v1640
        %v1645 = vadd.f32 %v1621, %v1641
        %1646 = vst.msk [vmem:[%s507] sm:$0xff] %vm1130, %v1642
        %1647 = vst.msk [vmem:[%s507 + $0x8] sm:$0xff] %vm1130, %v1643
        %1648 = vst.msk [vmem:[%s507 + $0x10] sm:$0xff] %vm1130, %v1644
        %1649 = vst.msk [vmem:[%s507 + $0x18] sm:$0xff] %vm1130, %v1645
        %s1650 = smul.u32 4, %s27
        %p1651 = scmp.lt.s32.totalorder %s1650, 7
        %s1652 = scalar_select %p1651, %s1650, 7
        %s1653 = smul.addr %s1652, 8
        %s1654 = scalar_lea.vmem %s9, %s1653
        // Predicated region
        $region77: #{tpu_custom_call.1} parent=55 // pred_check
          %p1655 = pneg %p259
        $region78: #{tpu_custom_call.1} parent=55 // pred_check_branch
          %1657 = sbr.rel (%p1655) target = $region80
        $region79: #{tpu_custom_call.1} parent=55 // pred_region
          %s1658 = smul.u32 4, %s27
        $region80: #{tpu_custom_call.1} parent=55 // pred_fallthru
          _
      $region56: #{tpu_custom_call.1} parent=5 // pred_fallthru
        _
      %p1659 = scmp.le.s32.totalorder 2, %s22
      // Predicated region
      $region81: #{tpu_custom_call.1} parent=5 // pred_check
        %p1660 = pneg %p1659
      $region82: #{tpu_custom_call.1} parent=5 // pred_check_branch
        %1662 = sbr.rel (%p1660) target = $region84
      $region83: #{tpu_custom_call.1} parent=5 // pred_region
        %s1663 = ssub.s32 %s22, 2
        // Predicated region
        $region85: #{tpu_custom_call.1} parent=83 // pred_check
          %p1664 = pneg %p265
        $region86: #{tpu_custom_call.1} parent=83 // pred_check_branch
          %1666 = sbr.rel (%p1664) target = $region88
        $region87: #{tpu_custom_call.1} parent=83 // pred_region
          %s1667 = smul.u32 4, %s28
          %p1668 = scmp.lt.s32.totalorder %s1667, 7
          %s1669 = scalar_select %p1668, %s1667, 7
          %s1670 = smul.addr %s1669, 8
          %s1671 = scalar_lea.vmem %s9, %s1670
        $region88: #{tpu_custom_call.1} parent=83 // pred_fallthru
          _
      $region84: #{tpu_custom_call.1} parent=5 // pred_fallthru
        _
    $region6: #{tpu_custom_call.1} parent=1 // loop_footer
      %s26 = sadd.s32 1, %s22
    $region7: #{tpu_custom_call.1} parent=1 // loop_footer_branch
      %21 = sbr.rel target = $region3
    $region8: #{tpu_custom_call.1} parent=1 // loop_exit
      _
    %1672 = vsyncpa [#allocation3], 1
    %s1673 = scalar_lea.sflag [#allocation3], 1
    %1674 = vsyncpa %s1673, 1
    %1675 = vsyncpa [#allocation5], 1
    %s1676 = scalar_lea.sflag [#allocation5], 1
    %1677 = vsyncpa %s1676, 1
    %1678 = vsyncpa [#allocation8], 1

</llo_original>
